<compile_context>
chip_gen: v6e
topology: v6e:2x2x1
jax: 0.10.0
libtpu: 0.0.40
codegen_flags: <defaults>
</compile_context>

<pallas_src>
import functools

import jax
import jax.numpy as jnp
import numpy as np
from jax.experimental import pallas as pl
from jax.experimental.pallas import tpu as pltpu

MAX_PAD = 3          # padding needed by the largest kernel (k=7)
HALO = 8             # one 8-row sublane group of halo on each side of an L tile
LN_EPS = 1e-5
MAX_L_TILE = 2048    # upper cap on the L tile (VMEM budget decides the actual value)


def _cdiv(a, b):
    return -(-a // b)


def _round_up(a, b):
    return _cdiv(a, b) * b


def _mscale_kernel(x_cur_ref, x_prev_ref, x_next_ref, w_ref,
                   bias_ref, gamma_ref, beta_ref, out_ref,
                   win_ref, col_ref, *, c4):
    li = pl.program_id(1)
    nl = pl.num_programs(1)
    LT = out_ref.shape[1]
    C_in = x_cur_ref.shape[2]
    C4p = out_ref.shape[2]

    halo_zeros = jnp.zeros((HALO, C_in), win_ref.dtype)

    # --- halo window (HALO + LT + HALO, C_in), f32, all writes 8-row aligned ---
    @pl.when(li == 0)
    def _():
        win_ref[0:HALO, :] = halo_zeros            # conv zero padding at seq start

    @pl.when(li > 0)
    def _():
        win_ref[0:HALO, :] = x_prev_ref[0]         # last rows of the previous tile

    win_ref[HALO:HALO + LT, :] = x_cur_ref[0]

    @pl.when(li == nl - 1)
    def _():
        win_ref[HALO + LT:2 * HALO + LT, :] = halo_zeros   # zero padding at seq end

    @pl.when(li < nl - 1)
    def _():
        win_ref[HALO + LT:2 * HALO + LT, :] = x_next_ref[0]

    # --- im2col: (LT, 7*C_in) bf16; column block t holds x[i + t - 3] ---
    base = HALO - MAX_PAD
    for t in range(7):
        col_ref[:, t * C_in:(t + 1) * C_in] = (
            win_ref[base + t:base + t + LT, :].astype(jnp.bfloat16))

    # --- single MXU matmul: K = 7*C_in, bf16 operands, f32 accumulation ---
    y = jnp.dot(col_ref[...], w_ref[...], preferred_element_type=jnp.float32)
    y = y + bias_ref[...]                          # (LT, C4p), padded cols are exactly 0

    # --- LayerNorm over the real c4 features (padded columns of y are 0) ---
    inv_c4 = 1.0 / c4
    mean = jnp.sum(y, axis=-1, keepdims=True) * inv_c4
    diff = y - mean
    if C4p != c4:                                  # static branch: mask pad columns
        mask = jax.lax.broadcasted_iota(jnp.int32, (1, C4p), 1) < c4
        diff = jnp.where(mask, diff, 0.0)
    var = jnp.sum(diff * diff, axis=-1, keepdims=True) * inv_c4
    out = diff * jax.lax.rsqrt(var + LN_EPS) * gamma_ref[...] + beta_ref[...]
    out_ref[0] = out.astype(out_ref.dtype)


def _fuse_weights(w1, w3, w5, w7, c4p):
    """Fuse branch conv weights into (7*C_in, c4p) bf16, tap-major rows, zero-padded.

    Output-channel order is k=1, 3, 5, 7 (matches torch.cat); tap t of branch k sits
    at t = j + 3 - (k-1)//2.  Columns [4*C_out, c4p) are zero (lane padding).
    """
    C_in, C_out = w1.shape[1], w1.shape[2]
    W = jnp.zeros((7, C_in, c4p), jnp.float32)
    W = W.at[3, :, 0:C_out].set(w1[0])
    W = W.at[2:5, :, C_out:2 * C_out].set(w3)
    W = W.at[1:6, :, 2 * C_out:3 * C_out].set(w5)
    W = W.at[0:7, :, 3 * C_out:4 * C_out].set(w7)
    return W.reshape(7 * C_in, c4p).astype(jnp.bfloat16)


def _pad_vec(v, c4p):
    c4 = v.shape[0]
    v = v.astype(jnp.float32)
    if c4p != c4:
        v = jnp.pad(v, (0, c4p - c4))              # pad bias/gamma/beta with zeros
    return v.reshape(1, c4p)


def _vmem_capacity_bytes():
    try:
        info = pltpu.get_tpu_info()
        cap = int(getattr(info, "vmem_capacity_bytes", 0))
        if cap > 0:
            return cap
    except Exception:
        pass
    return 64 * 1024 * 1024        # conservative fallback (v7x per-TensorCore)


def _pick_tiling(L, C_in, C4p):
    """Pick L tile from the chip's VMEM budget, then pad L up to a multiple of it."""
    vmem = _vmem_capacity_bytes()
    per_row = (2 * 4 * C_in        # x tile, f32, double-buffered
               + 2 * 4 * C4p       # out tile, f32, double-buffered
               + 4 * C_in          # halo window scratch, f32
               + 2 * 7 * C_in)     # im2col scratch, bf16
    const = (2 * 2 * 7 * C_in * C4p            # fused weight (worst case: 2 buffers)
             + 2 * 2 * HALO * C_in * 4 * 2     # halo input blocks
             + 3 * 2 * C4p * 4)                # bias / gamma / beta
    budget = max(int(vmem * 0.45) - const, 1 << 19)
    lt_cap = max(8, min(MAX_L_TILE, (budget // per_row) // 8 * 8))
    lp8 = _round_up(L, 8)
    lt_cap = min(lt_cap, lp8)
    n_l = _cdiv(lp8, lt_cap)
    lt = _round_up(_cdiv(lp8, n_l), 8)         # balanced tiles, minimal padding
    return lt, n_l, n_l * lt, vmem


def multi_scale_conv(x, w1, w3, w5, w7, bias, gamma, beta):
    """x: (B, L, C_in) f32.  w_k: (k, C_in, C_out).  bias/gamma/beta: (4*C_out,)."""
    B, L, C_in = x.shape
    C_out = w1.shape[2]
    C4 = 4 * C_out
    C4p = _round_up(C4, 128)                   # lane-dense output / MXU-friendly N

    LT, nL, Lp, vmem = _pick_tiling(L, C_in, C4p)
    if Lp != L:
        # Zero pad rows behave exactly like the conv's zero padding; sliced off below.
        x = jnp.pad(x, ((0, 0), (0, Lp - L), (0, 0)))

    rb = LT // HALO                            # 8-row blocks per L tile
    total_rb = Lp // HALO                      # 8-row blocks per sequence

    w_all = _fuse_weights(w1, w3, w5, w7, C4p)
    bias2, gamma2, beta2 = (_pad_vec(v, C4p) for v in (bias, gamma, beta))

    cost = pl.CostEstimate(
        flops=int(2 * B * Lp * 7 * C_in * C4p + 8 * B * Lp * C4p),
        transcendentals=int(B * Lp),
        bytes_accessed=int(B * Lp * C_in * 4 + 7 * C_in * C4p * 2
                           + B * Lp * C4p * 4 + 3 * C4p * 4))

    kernel = functools.partial(_mscale_kernel, c4=C4)

    def build(single_buffer_consts):
        def const_spec(shape):
            imap = lambda b, li, _n=len(shape): (0,) * _n
            if single_buffer_consts:
                return pl.BlockSpec(shape, imap, pipeline_mode=pl.Buffered(1))
            return pl.BlockSpec(shape, imap)

        grid_spec = pltpu.PrefetchScalarGridSpec(
            num_scalar_prefetch=0,
            grid=(B, nL),
            in_specs=[
                # current L tile
                pl.BlockSpec((1, LT, C_in), lambda b, li: (b, li, 0)),
                # 8-row halo just before the tile (clamped; zeroed in-kernel at li==0)
                pl.BlockSpec((1, HALO, C_in),
                             lambda b, li: (b, jnp.maximum(li * rb - 1, 0), 0)),
                # 8-row halo just after the tile (clamped; zeroed at the last tile)
                pl.BlockSpec((1, HALO, C_in),
                             lambda b, li: (b, jnp.minimum((li + 1) * rb,
                                                           total_rb - 1), 0)),
                # grid-constant fused weight + LayerNorm params
                const_spec((7 * C_in, C4p)),
                const_spec((1, C4p)),
                const_spec((1, C4p)),
                const_spec((1, C4p)),
            ],
            out_specs=pl.BlockSpec((1, LT, C4p), lambda b, li: (b, li, 0)),
            scratch_shapes=[pltpu.VMEM((LT + 2 * HALO, C_in), jnp.float32),
                            pltpu.VMEM((LT, 7 * C_in), jnp.bfloat16)],
        )
        return pl.pallas_call(
            kernel,
            out_shape=jax.ShapeDtypeStruct((B, Lp, C4p), jnp.float32),
            grid_spec=grid_spec,
            compiler_params=pltpu.CompilerParams(
                dimension_semantics=("parallel", "parallel"),
                vmem_limit_bytes=int(vmem * 3 // 4)),
            cost_estimate=cost,
        )

    args = (x, x, x, w_all, bias2, gamma2, beta2)
    try:
        out = build(True)(*args)
    except Exception:
        # pipeline_mode / pl.Buffered(1) not supported by this JAX build: fall back to
        # default double-buffered grid-constant operands (correctness unaffected).
        out = build(False)(*args)

    return out[:, :L, :C4]


def _reference(x, w1, w3, w5, w7, bias, gamma, beta):
    """Pure-JAX f32 reference (same math as the PyTorch module)."""
    B, L, C_in = x.shape
    xp = jnp.pad(x, ((0, 0), (MAX_PAD, MAX_PAD), (0, 0)))
    outs = []
    for w in (w1, w3, w5, w7):
        k = w.shape[0]
        p = (k - 1) // 2
        acc = 0.0
        for j in range(k):
            s = MAX_PAD - p + j
            acc = acc + jnp.einsum('blc,co->blo', xp[:, s:s + L, :], w[j])
        outs.append(acc)
    y = jnp.concatenate(outs, axis=-1) + bias
    mean = jnp.mean(y, axis=-1, keepdims=True)
    var = jnp.mean((y - mean) ** 2, axis=-1, keepdims=True)
    return (y - mean) * jax.lax.rsqrt(var + LN_EPS) * gamma + beta


if __name__ == "__main__":
    def run_case(key, B, L, C_in, C_out):
        C4 = 4 * C_out
        keys = jax.random.split(key, 9)
        x = jax.random.normal(keys[0], (B, L, C_in), jnp.float32)

        # Conv1d weights stored as (k, C_in, C_out) (transposed PyTorch (C_out,C_in,k)).
        def conv_init(k_rng, k):
            bound = 1.0 / np.sqrt(C_in * k)
            return jax.random.uniform(k_rng, (k, C_in, C_out), jnp.float32,
                                      minval=-bound, maxval=bound)

        w1 = conv_init(keys[1], 1)
        w3 = conv_init(keys[2], 3)
        w5 = conv_init(keys[3], 5)
        w7 = conv_init(keys[4], 7)
        bias = jnp.concatenate([                       # concat order: k=1, 3, 5, 7
            jax.random.uniform(keys[5], (C_out,), jnp.float32, -0.1, 0.1),
            jax.random.uniform(keys[6], (C_out,), jnp.float32, -0.1, 0.1),
            jax.random.uniform(keys[7], (C_out,), jnp.float32, -0.1, 0.1),
            jnp.linspace(-0.05, 0.05, C_out, dtype=jnp.float32)])
        gamma = 1.0 + 0.1 * jax.random.normal(keys[8], (C4,), jnp.float32)
        beta = jnp.linspace(-0.2, 0.2, C4, dtype=jnp.float32)

        out = jax.block_until_ready(
            multi_scale_conv(x, w1, w3, w5, w7, bias, gamma, beta))
        ref = _reference(x, w1, w3, w5, w7, bias, gamma, beta)
        # bf16 matmul operands (f32 accumulation) -> loosened tolerance vs f32 ref.
        np.testing.assert_allclose(np.asarray(out), np.asarray(ref),
                                   rtol=3e-2, atol=3e-2)

    root = jax.random.PRNGKey(0)
    k1, k2 = jax.random.split(root)
    run_case(k1, B=2, L=16, C_in=4, C_out=8)    # 4*C_out = 32  -> lane-padded path
    run_case(k2, B=2, L=19, C_in=8, C_out=32)   # 4*C_out = 128 -> lane-dense, tail pad
    print("KERNEL_OK")
</pallas_src>

<mosaic_0001>
module attributes {stable_mosaic.version = 11 : i64} {
  func.func @_mscale_kernel(%arg0: i32, %arg1: i32, %arg2: memref<1x16x4xf32, #tpu.memory_space<vmem>>, %arg3: memref<1x8x4xf32, #tpu.memory_space<vmem>>, %arg4: memref<1x8x4xf32, #tpu.memory_space<vmem>>, %arg5: memref<28x128xbf16, #tpu.memory_space<vmem>>, %arg6: memref<1x128xf32, #tpu.memory_space<vmem>>, %arg7: memref<1x128xf32, #tpu.memory_space<vmem>>, %arg8: memref<1x128xf32, #tpu.memory_space<vmem>>, %arg9: memref<1x16x128xf32, #tpu.memory_space<vmem>>, %arg10: memref<32x4xf32, #tpu.memory_space<vmem>>, %arg11: memref<16x28xbf16, #tpu.memory_space<vmem>>) attributes {dimension_semantics = [#tpu.dimension_semantics<parallel>, #tpu.dimension_semantics<parallel>], iteration_bounds = array<i64: 2, 1>, scalar_prefetch = 0 : i64, scratch_operands = 2 : i64, tpu.core_type = #tpu.core_type<tc>, window_params = [{transform_indices = @transform_0, window_bounds = array<i64: 1, 16, 4>}, {transform_indices = @transform_1, window_bounds = array<i64: 1, 8, 4>}, {transform_indices = @transform_2, window_bounds = array<i64: 1, 8, 4>}, {pipeline_mode = #tpu.pipeline_mode<synchronous>, transform_indices = @transform_3, window_bounds = array<i64: 28, 128>}, {pipeline_mode = #tpu.pipeline_mode<synchronous>, transform_indices = @transform_4, window_bounds = array<i64: 1, 128>}, {pipeline_mode = #tpu.pipeline_mode<synchronous>, transform_indices = @transform_5, window_bounds = array<i64: 1, 128>}, {pipeline_mode = #tpu.pipeline_mode<synchronous>, transform_indices = @transform_6, window_bounds = array<i64: 1, 128>}, {transform_indices = @transform_7, window_bounds = array<i64: 1, 16, 128>}]} {
    %cst = arith.constant 0.000000e+00 : f32
    %0 = vector.broadcast %cst : f32 to vector<8x4xf32>
    %c0_i32 = arith.constant 0 : i32
    %1 = arith.cmpi eq, %arg1, %c0_i32 : i32
    %2 = arith.extui %1 : i1 to i32
    %c0_i32_0 = arith.constant 0 : i32
    %3 = arith.cmpi ne, %2, %c0_i32_0 : i32
    scf.if %3 {
      %c0_47 = arith.constant 0 : index
      %c0_48 = arith.constant 0 : index
      %75 = vector.load %arg10[%c0_47, %c0_48] : memref<32x4xf32, #tpu.memory_space<vmem>>, vector<8x4xf32>
      tpu.vector_store %arg10[%c0_47, %c0_48], %0 {strides = array<i32>} : memref<32x4xf32, #tpu.memory_space<vmem>>, vector<8x4xf32>,
    } else {
    }
    %c0_i32_1 = arith.constant 0 : i32
    %4 = arith.cmpi sgt, %arg1, %c0_i32_1 : i32
    %5 = arith.extui %4 : i1 to i32
    %c0_i32_2 = arith.constant 0 : i32
    %6 = arith.cmpi ne, %5, %c0_i32_2 : i32
    scf.if %6 {
      %c0_47 = arith.constant 0 : index
      %c0_48 = arith.constant 0 : index
      %c0_49 = arith.constant 0 : index
      %75 = vector.load %arg3[%c0_47, %c0_48, %c0_49] : memref<1x8x4xf32, #tpu.memory_space<vmem>>, vector<1x8x4xf32>
      %76 = vector.shape_cast %75 : vector<1x8x4xf32> to vector<8x4xf32>
      %c0_50 = arith.constant 0 : index
      %c0_51 = arith.constant 0 : index
      %77 = vector.load %arg10[%c0_50, %c0_51] : memref<32x4xf32, #tpu.memory_space<vmem>>, vector<8x4xf32>
      tpu.vector_store %arg10[%c0_50, %c0_51], %76 {strides = array<i32>} : memref<32x4xf32, #tpu.memory_space<vmem>>, vector<8x4xf32>,
    } else {
    }
    %c0 = arith.constant 0 : index
    %c0_3 = arith.constant 0 : index
    %c0_4 = arith.constant 0 : index
    %7 = vector.load %arg2[%c0, %c0_3, %c0_4] : memref<1x16x4xf32, #tpu.memory_space<vmem>>, vector<1x16x4xf32>
    %8 = vector.shape_cast %7 : vector<1x16x4xf32> to vector<16x4xf32>
    %c8 = arith.constant 8 : index
    %c0_5 = arith.constant 0 : index
    %9 = vector.load %arg10[%c8, %c0_5] : memref<32x4xf32, #tpu.memory_space<vmem>>, vector<16x4xf32>
    tpu.vector_store %arg10[%c8, %c0_5], %8 {strides = array<i32>} : memref<32x4xf32, #tpu.memory_space<vmem>>, vector<16x4xf32>,
    %c0_i32_6 = arith.constant 0 : i32
    %10 = arith.cmpi eq, %arg1, %c0_i32_6 : i32
    %11 = arith.extui %10 : i1 to i32
    %c0_i32_7 = arith.constant 0 : i32
    %12 = arith.cmpi ne, %11, %c0_i32_7 : i32
    scf.if %12 {
      %c24_47 = arith.constant 24 : index
      %c0_48 = arith.constant 0 : index
      %75 = vector.load %arg10[%c24_47, %c0_48] : memref<32x4xf32, #tpu.memory_space<vmem>>, vector<8x4xf32>
      tpu.vector_store %arg10[%c24_47, %c0_48], %0 {strides = array<i32>} : memref<32x4xf32, #tpu.memory_space<vmem>>, vector<8x4xf32>,
    } else {
    }
    %c0_i32_8 = arith.constant 0 : i32
    %13 = arith.cmpi slt, %arg1, %c0_i32_8 : i32
    %14 = arith.extui %13 : i1 to i32
    %c0_i32_9 = arith.constant 0 : i32
    %15 = arith.cmpi ne, %14, %c0_i32_9 : i32
    scf.if %15 {
      %c0_47 = arith.constant 0 : index
      %c0_48 = arith.constant 0 : index
      %c0_49 = arith.constant 0 : index
      %75 = vector.load %arg4[%c0_47, %c0_48, %c0_49] : memref<1x8x4xf32, #tpu.memory_space<vmem>>, vector<1x8x4xf32>
      %76 = vector.shape_cast %75 : vector<1x8x4xf32> to vector<8x4xf32>
      %c24_50 = arith.constant 24 : index
      %c0_51 = arith.constant 0 : index
      %77 = vector.load %arg10[%c24_50, %c0_51] : memref<32x4xf32, #tpu.memory_space<vmem>>, vector<8x4xf32>
      tpu.vector_store %arg10[%c24_50, %c0_51], %76 {strides = array<i32>} : memref<32x4xf32, #tpu.memory_space<vmem>>, vector<8x4xf32>,
    } else {
    }
    %c5 = arith.constant 5 : index
    %c0_10 = arith.constant 0 : index
    %16 = vector.load %arg10[%c5, %c0_10] : memref<32x4xf32, #tpu.memory_space<vmem>>, vector<16x4xf32>
    %17 = arith.truncf %16 : vector<16x4xf32> to vector<16x4xbf16>
    %c0_11 = arith.constant 0 : index
    %c0_12 = arith.constant 0 : index
    %18 = vector.load %arg11[%c0_11, %c0_12] : memref<16x28xbf16, #tpu.memory_space<vmem>>, vector<16x4xbf16>
    tpu.vector_store %arg11[%c0_11, %c0_12], %17 {strides = array<i32>} : memref<16x28xbf16, #tpu.memory_space<vmem>>, vector<16x4xbf16>,
    %c6 = arith.constant 6 : index
    %c0_13 = arith.constant 0 : index
    %19 = vector.load %arg10[%c6, %c0_13] : memref<32x4xf32, #tpu.memory_space<vmem>>, vector<16x4xf32>
    %20 = arith.truncf %19 : vector<16x4xf32> to vector<16x4xbf16>
    %c0_14 = arith.constant 0 : index
    %c4 = arith.constant 4 : index
    %21 = vector.load %arg11[%c0_14, %c4] : memref<16x28xbf16, #tpu.memory_space<vmem>>, vector<16x4xbf16>
    tpu.vector_store %arg11[%c0_14, %c4], %20 {strides = array<i32>} : memref<16x28xbf16, #tpu.memory_space<vmem>>, vector<16x4xbf16>,
    %c7 = arith.constant 7 : index
    %c0_15 = arith.constant 0 : index
    %22 = vector.load %arg10[%c7, %c0_15] : memref<32x4xf32, #tpu.memory_space<vmem>>, vector<16x4xf32>
    %23 = arith.truncf %22 : vector<16x4xf32> to vector<16x4xbf16>
    %c0_16 = arith.constant 0 : index
    %c8_17 = arith.constant 8 : index
    %24 = vector.load %arg11[%c0_16, %c8_17] : memref<16x28xbf16, #tpu.memory_space<vmem>>, vector<16x4xbf16>
    tpu.vector_store %arg11[%c0_16, %c8_17], %23 {strides = array<i32>} : memref<16x28xbf16, #tpu.memory_space<vmem>>, vector<16x4xbf16>,
    %c8_18 = arith.constant 8 : index
    %c0_19 = arith.constant 0 : index
    %25 = vector.load %arg10[%c8_18, %c0_19] : memref<32x4xf32, #tpu.memory_space<vmem>>, vector<16x4xf32>
    %26 = arith.truncf %25 : vector<16x4xf32> to vector<16x4xbf16>
    %c0_20 = arith.constant 0 : index
    %c12 = arith.constant 12 : index
    %27 = vector.load %arg11[%c0_20, %c12] : memref<16x28xbf16, #tpu.memory_space<vmem>>, vector<16x4xbf16>
    tpu.vector_store %arg11[%c0_20, %c12], %26 {strides = array<i32>} : memref<16x28xbf16, #tpu.memory_space<vmem>>, vector<16x4xbf16>,
    %c9 = arith.constant 9 : index
    %c0_21 = arith.constant 0 : index
    %28 = vector.load %arg10[%c9, %c0_21] : memref<32x4xf32, #tpu.memory_space<vmem>>, vector<16x4xf32>
    %29 = arith.truncf %28 : vector<16x4xf32> to vector<16x4xbf16>
    %c0_22 = arith.constant 0 : index
    %c16 = arith.constant 16 : index
    %30 = vector.load %arg11[%c0_22, %c16] : memref<16x28xbf16, #tpu.memory_space<vmem>>, vector<16x4xbf16>
    tpu.vector_store %arg11[%c0_22, %c16], %29 {strides = array<i32>} : memref<16x28xbf16, #tpu.memory_space<vmem>>, vector<16x4xbf16>,
    %c10 = arith.constant 10 : index
    %c0_23 = arith.constant 0 : index
    %31 = vector.load %arg10[%c10, %c0_23] : memref<32x4xf32, #tpu.memory_space<vmem>>, vector<16x4xf32>
    %32 = arith.truncf %31 : vector<16x4xf32> to vector<16x4xbf16>
    %c0_24 = arith.constant 0 : index
    %c20 = arith.constant 20 : index
    %33 = vector.load %arg11[%c0_24, %c20] : memref<16x28xbf16, #tpu.memory_space<vmem>>, vector<16x4xbf16>
    tpu.vector_store %arg11[%c0_24, %c20], %32 {strides = array<i32>} : memref<16x28xbf16, #tpu.memory_space<vmem>>, vector<16x4xbf16>,
    %c11 = arith.constant 11 : index
    %c0_25 = arith.constant 0 : index
    %34 = vector.load %arg10[%c11, %c0_25] : memref<32x4xf32, #tpu.memory_space<vmem>>, vector<16x4xf32>
    %35 = arith.truncf %34 : vector<16x4xf32> to vector<16x4xbf16>
    %c0_26 = arith.constant 0 : index
    %c24 = arith.constant 24 : index
    %36 = vector.load %arg11[%c0_26, %c24] : memref<16x28xbf16, #tpu.memory_space<vmem>>, vector<16x4xbf16>
    tpu.vector_store %arg11[%c0_26, %c24], %35 {strides = array<i32>} : memref<16x28xbf16, #tpu.memory_space<vmem>>, vector<16x4xbf16>,
    %c0_27 = arith.constant 0 : index
    %c0_28 = arith.constant 0 : index
    %37 = vector.load %arg11[%c0_27, %c0_28] : memref<16x28xbf16, #tpu.memory_space<vmem>>, vector<16x28xbf16>
    %c0_29 = arith.constant 0 : index
    %c0_30 = arith.constant 0 : index
    %38 = vector.load %arg5[%c0_29, %c0_30] : memref<28x128xbf16, #tpu.memory_space<vmem>>, vector<28x128xbf16>
    %cst_31 = arith.constant dense<0.000000e+00> : vector<16x128xf32>
    %39 = tpu.matmul %37, %38, %cst_31 {dimension_numbers = #tpu.dot_dimension_numbers<[1], [0], [0], [1], [0, 0, 1, 1], [], []>} : vector<16x28xbf16>, vector<28x128xbf16>, vector<16x128xf32> -> vector<16x128xf32>
    %c0_32 = arith.constant 0 : index
    %c0_33 = arith.constant 0 : index
    %40 = vector.load %arg6[%c0_32, %c0_33] : memref<1x128xf32, #tpu.memory_space<vmem>>, vector<1x128xf32>
    %41 = vector.broadcast %40 : vector<1x128xf32> to vector<16x128xf32>
    %42 = arith.addf %39, %41 : vector<16x128xf32>
    %cst_34 = arith.constant dense<0.000000e+00> : vector<16xf32>
    %43 = vector.multi_reduction <add>, %42, %cst_34 [1] : vector<16x128xf32> to vector<16xf32>
    %44 = vector.shape_cast %43 : vector<16xf32> to vector<16x1xf32>
    %cst_35 = arith.constant 3.125000e-02 : f32
    %45 = vector.broadcast %cst_35 : f32 to vector<16x1xf32>
    %46 = arith.mulf %44, %45 : vector<16x1xf32>
    %47 = vector.broadcast %46 : vector<16x1xf32> to vector<16x128xf32>
    %48 = arith.subf %42, %47 : vector<16x128xf32>
    %49 = tpu.iota {dimensions = array<i32: 1>} : vector<1x128xi32>
    %c32_i32 = arith.constant 32 : i32
    %50 = vector.broadcast %c32_i32 : i32 to vector<1x128xi32>
    %51 = arith.cmpi slt, %49, %50 : vector<1x128xi32>
    %cst_36 = arith.constant 0.000000e+00 : f32
    %52 = vector.shape_cast %51 : vector<1x128xi1> to vector<1x128xi1>
    %53 = vector.broadcast %52 : vector<1x128xi1> to vector<16x128xi1>
    %54 = vector.broadcast %cst_36 : f32 to vector<16x128xf32>
    %55 = arith.select %53, %48, %54 : vector<16x128xi1>, vector<16x128xf32>
    %56 = arith.mulf %55, %55 : vector<16x128xf32>
    %cst_37 = arith.constant dense<0.000000e+00> : vector<16xf32>
    %57 = vector.multi_reduction <add>, %56, %cst_37 [1] : vector<16x128xf32> to vector<16xf32>
    %58 = vector.shape_cast %57 : vector<16xf32> to vector<16x1xf32>
    %cst_38 = arith.constant 3.125000e-02 : f32
    %59 = vector.broadcast %cst_38 : f32 to vector<16x1xf32>
    %60 = arith.mulf %58, %59 : vector<16x1xf32>
    %cst_39 = arith.constant 9.99999974E-6 : f32
    %61 = vector.broadcast %cst_39 : f32 to vector<16x1xf32>
    %62 = arith.addf %60, %61 : vector<16x1xf32>
    %63 = math.rsqrt %62 : vector<16x1xf32>
    %64 = vector.broadcast %63 : vector<16x1xf32> to vector<16x128xf32>
    %65 = arith.mulf %55, %64 : vector<16x128xf32>
    %c0_40 = arith.constant 0 : index
    %c0_41 = arith.constant 0 : index
    %66 = vector.load %arg7[%c0_40, %c0_41] : memref<1x128xf32, #tpu.memory_space<vmem>>, vector<1x128xf32>
    %67 = vector.broadcast %66 : vector<1x128xf32> to vector<16x128xf32>
    %68 = arith.mulf %65, %67 : vector<16x128xf32>
    %c0_42 = arith.constant 0 : index
    %c0_43 = arith.constant 0 : index
    %69 = vector.load %arg8[%c0_42, %c0_43] : memref<1x128xf32, #tpu.memory_space<vmem>>, vector<1x128xf32>
    %70 = vector.broadcast %69 : vector<1x128xf32> to vector<16x128xf32>
    %71 = arith.addf %68, %70 : vector<16x128xf32>
    %c0_44 = arith.constant 0 : index
    %c0_45 = arith.constant 0 : index
    %c0_46 = arith.constant 0 : index
    %72 = vector.load %arg9[%c0_44, %c0_45, %c0_46] : memref<1x16x128xf32, #tpu.memory_space<vmem>>, vector<1x16x128xf32>
    %73 = vector.shape_cast %72 : vector<1x16x128xf32> to vector<16x128xf32>
    %74 = vector.shape_cast %71 : vector<16x128xf32> to vector<1x16x128xf32>
    tpu.vector_store %arg9[%c0_44, %c0_45, %c0_46], %74 {strides = array<i32>} : memref<1x16x128xf32, #tpu.memory_space<vmem>>, vector<1x16x128xf32>,
    return
  }
  func.func @transform_0(%arg0: i32, %arg1: i32) -> (i32, i32, i32) {
    %c0_i32 = arith.constant 0 : i32
    %c0_i32_0 = arith.constant 0 : i32
    return %arg0, %arg1, %c0_i32 : i32, i32, i32
  }
  func.func @transform_1(%arg0: i32, %arg1: i32) -> (i32, i32, i32) {
    %c2_i32 = arith.constant 2 : i32
    %0 = arith.muli %arg1, %c2_i32 : i32
    %c1_i32 = arith.constant 1 : i32
    %1 = arith.subi %0, %c1_i32 : i32
    %c0_i32 = arith.constant 0 : i32
    %2 = arith.maxsi %1, %c0_i32 : i32
    %c0_i32_0 = arith.constant 0 : i32
    %c0_i32_1 = arith.constant 0 : i32
    return %arg0, %2, %c0_i32_0 : i32, i32, i32
  }
  func.func @transform_2(%arg0: i32, %arg1: i32) -> (i32, i32, i32) {
    %c1_i32 = arith.constant 1 : i32
    %0 = arith.addi %arg1, %c1_i32 : i32
    %c2_i32 = arith.constant 2 : i32
    %1 = arith.muli %0, %c2_i32 : i32
    %c1_i32_0 = arith.constant 1 : i32
    %2 = arith.minsi %1, %c1_i32_0 : i32
    %c0_i32 = arith.constant 0 : i32
    %c0_i32_1 = arith.constant 0 : i32
    return %arg0, %2, %c0_i32 : i32, i32, i32
  }
  func.func @transform_3(%arg0: i32, %arg1: i32) -> (i32, i32) {
    %c0_i32 = arith.constant 0 : i32
    %c0_i32_0 = arith.constant 0 : i32
    %c0_i32_1 = arith.constant 0 : i32
    return %c0_i32, %c0_i32_0 : i32, i32
  }
  func.func @transform_4(%arg0: i32, %arg1: i32) -> (i32, i32) {
    %c0_i32 = arith.constant 0 : i32
    %c0_i32_0 = arith.constant 0 : i32
    %c0_i32_1 = arith.constant 0 : i32
    return %c0_i32, %c0_i32_0 : i32, i32
  }
  func.func @transform_5(%arg0: i32, %arg1: i32) -> (i32, i32) {
    %c0_i32 = arith.constant 0 : i32
    %c0_i32_0 = arith.constant 0 : i32
    %c0_i32_1 = arith.constant 0 : i32
    return %c0_i32, %c0_i32_0 : i32, i32
  }
  func.func @transform_6(%arg0: i32, %arg1: i32) -> (i32, i32) {
    %c0_i32 = arith.constant 0 : i32
    %c0_i32_0 = arith.constant 0 : i32
    %c0_i32_1 = arith.constant 0 : i32
    return %c0_i32, %c0_i32_0 : i32, i32
  }
  func.func @transform_7(%arg0: i32, %arg1: i32) -> (i32, i32, i32) {
    %c0_i32 = arith.constant 0 : i32
    %c0_i32_0 = arith.constant 0 : i32
    return %arg0, %arg1, %c0_i32 : i32, i32, i32
  }
}

module attributes {stable_mosaic.version = 11 : i64} {
  func.func @_mscale_kernel(%arg0: i32, %arg1: i32, %arg2: memref<1x16x4xf32, #tpu.memory_space<vmem>>, %arg3: memref<1x8x4xf32, #tpu.memory_space<vmem>>, %arg4: memref<1x8x4xf32, #tpu.memory_space<vmem>>, %arg5: memref<28x128xbf16, #tpu.memory_space<vmem>>, %arg6: memref<1x128xf32, #tpu.memory_space<vmem>>, %arg7: memref<1x128xf32, #tpu.memory_space<vmem>>, %arg8: memref<1x128xf32, #tpu.memory_space<vmem>>, %arg9: memref<1x16x128xf32, #tpu.memory_space<vmem>>, %arg10: memref<32x4xf32, #tpu.memory_space<vmem>>, %arg11: memref<16x28xbf16, #tpu.memory_space<vmem>>) attributes {dimension_semantics = [#tpu.dimension_semantics<parallel>, #tpu.dimension_semantics<parallel>], iteration_bounds = array<i64: 2, 1>, scalar_prefetch = 0 : i64, scratch_operands = 2 : i64, tpu.core_type = #tpu.core_type<tc>, window_params = [{transform_indices = @transform_0, window_bounds = array<i64: 1, 16, 4>}, {transform_indices = @transform_1, window_bounds = array<i64: 1, 8, 4>}, {transform_indices = @transform_2, window_bounds = array<i64: 1, 8, 4>}, {pipeline_mode = #tpu.pipeline_mode<synchronous>, transform_indices = @transform_3, window_bounds = array<i64: 28, 128>}, {pipeline_mode = #tpu.pipeline_mode<synchronous>, transform_indices = @transform_4, window_bounds = array<i64: 1, 128>}, {pipeline_mode = #tpu.pipeline_mode<synchronous>, transform_indices = @transform_5, window_bounds = array<i64: 1, 128>}, {pipeline_mode = #tpu.pipeline_mode<synchronous>, transform_indices = @transform_6, window_bounds = array<i64: 1, 128>}, {transform_indices = @transform_7, window_bounds = array<i64: 1, 16, 128>}]} {
    %cst = arith.constant 0.000000e+00 : f32
    %0 = vector.broadcast %cst : f32 to vector<8x4xf32>
    %c0_i32 = arith.constant 0 : i32
    %1 = arith.cmpi eq, %arg1, %c0_i32 : i32
    %2 = arith.extui %1 : i1 to i32
    %c0_i32_0 = arith.constant 0 : i32
    %3 = arith.cmpi ne, %2, %c0_i32_0 : i32
    scf.if %3 {
      %c0_47 = arith.constant 0 : index
      %c0_48 = arith.constant 0 : index
      %75 = vector.load %arg10[%c0_47, %c0_48] : memref<32x4xf32, #tpu.memory_space<vmem>>, vector<8x4xf32>
      tpu.vector_store %arg10[%c0_47, %c0_48], %0 {strides = array<i32>} : memref<32x4xf32, #tpu.memory_space<vmem>>, vector<8x4xf32>,
    } else {
    }
    %c0_i32_1 = arith.constant 0 : i32
    %4 = arith.cmpi sgt, %arg1, %c0_i32_1 : i32
    %5 = arith.extui %4 : i1 to i32
    %c0_i32_2 = arith.constant 0 : i32
    %6 = arith.cmpi ne, %5, %c0_i32_2 : i32
    scf.if %6 {
      %c0_47 = arith.constant 0 : index
      %c0_48 = arith.constant 0 : index
      %c0_49 = arith.constant 0 : index
      %75 = vector.load %arg3[%c0_47, %c0_48, %c0_49] : memref<1x8x4xf32, #tpu.memory_space<vmem>>, vector<1x8x4xf32>
      %76 = vector.shape_cast %75 : vector<1x8x4xf32> to vector<8x4xf32>
      %c0_50 = arith.constant 0 : index
      %c0_51 = arith.constant 0 : index
      %77 = vector.load %arg10[%c0_50, %c0_51] : memref<32x4xf32, #tpu.memory_space<vmem>>, vector<8x4xf32>
      tpu.vector_store %arg10[%c0_50, %c0_51], %76 {strides = array<i32>} : memref<32x4xf32, #tpu.memory_space<vmem>>, vector<8x4xf32>,
    } else {
    }
    %c0 = arith.constant 0 : index
    %c0_3 = arith.constant 0 : index
    %c0_4 = arith.constant 0 : index
    %7 = vector.load %arg2[%c0, %c0_3, %c0_4] : memref<1x16x4xf32, #tpu.memory_space<vmem>>, vector<1x16x4xf32>
    %8 = vector.shape_cast %7 : vector<1x16x4xf32> to vector<16x4xf32>
    %c8 = arith.constant 8 : index
    %c0_5 = arith.constant 0 : index
    %9 = vector.load %arg10[%c8, %c0_5] : memref<32x4xf32, #tpu.memory_space<vmem>>, vector<16x4xf32>
    tpu.vector_store %arg10[%c8, %c0_5], %8 {strides = array<i32>} : memref<32x4xf32, #tpu.memory_space<vmem>>, vector<16x4xf32>,
    %c0_i32_6 = arith.constant 0 : i32
    %10 = arith.cmpi eq, %arg1, %c0_i32_6 : i32
    %11 = arith.extui %10 : i1 to i32
    %c0_i32_7 = arith.constant 0 : i32
    %12 = arith.cmpi ne, %11, %c0_i32_7 : i32
    scf.if %12 {
      %c24_47 = arith.constant 24 : index
      %c0_48 = arith.constant 0 : index
      %75 = vector.load %arg10[%c24_47, %c0_48] : memref<32x4xf32, #tpu.memory_space<vmem>>, vector<8x4xf32>
      tpu.vector_store %arg10[%c24_47, %c0_48], %0 {strides = array<i32>} : memref<32x4xf32, #tpu.memory_space<vmem>>, vector<8x4xf32>,
    } else {
    }
    %c0_i32_8 = arith.constant 0 : i32
    %13 = arith.cmpi slt, %arg1, %c0_i32_8 : i32
    %14 = arith.extui %13 : i1 to i32
    %c0_i32_9 = arith.constant 0 : i32
    %15 = arith.cmpi ne, %14, %c0_i32_9 : i32
    scf.if %15 {
      %c0_47 = arith.constant 0 : index
      %c0_48 = arith.constant 0 : index
      %c0_49 = arith.constant 0 : index
      %75 = vector.load %arg4[%c0_47, %c0_48, %c0_49] : memref<1x8x4xf32, #tpu.memory_space<vmem>>, vector<1x8x4xf32>
      %76 = vector.shape_cast %75 : vector<1x8x4xf32> to vector<8x4xf32>
      %c24_50 = arith.constant 24 : index
      %c0_51 = arith.constant 0 : index
      %77 = vector.load %arg10[%c24_50, %c0_51] : memref<32x4xf32, #tpu.memory_space<vmem>>, vector<8x4xf32>
      tpu.vector_store %arg10[%c24_50, %c0_51], %76 {strides = array<i32>} : memref<32x4xf32, #tpu.memory_space<vmem>>, vector<8x4xf32>,
    } else {
    }
    %c5 = arith.constant 5 : index
    %c0_10 = arith.constant 0 : index
    %16 = vector.load %arg10[%c5, %c0_10] : memref<32x4xf32, #tpu.memory_space<vmem>>, vector<16x4xf32>
    %17 = arith.truncf %16 : vector<16x4xf32> to vector<16x4xbf16>
    %c0_11 = arith.constant 0 : index
    %c0_12 = arith.constant 0 : index
    %18 = vector.load %arg11[%c0_11, %c0_12] : memref<16x28xbf16, #tpu.memory_space<vmem>>, vector<16x4xbf16>
    tpu.vector_store %arg11[%c0_11, %c0_12], %17 {strides = array<i32>} : memref<16x28xbf16, #tpu.memory_space<vmem>>, vector<16x4xbf16>,
    %c6 = arith.constant 6 : index
    %c0_13 = arith.constant 0 : index
    %19 = vector.load %arg10[%c6, %c0_13] : memref<32x4xf32, #tpu.memory_space<vmem>>, vector<16x4xf32>
    %20 = arith.truncf %19 : vector<16x4xf32> to vector<16x4xbf16>
    %c0_14 = arith.constant 0 : index
    %c4 = arith.constant 4 : index
    %21 = vector.load %arg11[%c0_14, %c4] : memref<16x28xbf16, #tpu.memory_space<vmem>>, vector<16x4xbf16>
    tpu.vector_store %arg11[%c0_14, %c4], %20 {strides = array<i32>} : memref<16x28xbf16, #tpu.memory_space<vmem>>, vector<16x4xbf16>,
    %c7 = arith.constant 7 : index
    %c0_15 = arith.constant 0 : index
    %22 = vector.load %arg10[%c7, %c0_15] : memref<32x4xf32, #tpu.memory_space<vmem>>, vector<16x4xf32>
    %23 = arith.truncf %22 : vector<16x4xf32> to vector<16x4xbf16>
    %c0_16 = arith.constant 0 : index
    %c8_17 = arith.constant 8 : index
    %24 = vector.load %arg11[%c0_16, %c8_17] : memref<16x28xbf16, #tpu.memory_space<vmem>>, vector<16x4xbf16>
    tpu.vector_store %arg11[%c0_16, %c8_17], %23 {strides = array<i32>} : memref<16x28xbf16, #tpu.memory_space<vmem>>, vector<16x4xbf16>,
    %c8_18 = arith.constant 8 : index
    %c0_19 = arith.constant 0 : index
    %25 = vector.load %arg10[%c8_18, %c0_19] : memref<32x4xf32, #tpu.memory_space<vmem>>, vector<16x4xf32>
    %26 = arith.truncf %25 : vector<16x4xf32> to vector<16x4xbf16>
    %c0_20 = arith.constant 0 : index
    %c12 = arith.constant 12 : index
    %27 = vector.load %arg11[%c0_20, %c12] : memref<16x28xbf16, #tpu.memory_space<vmem>>, vector<16x4xbf16>
    tpu.vector_store %arg11[%c0_20, %c12], %26 {strides = array<i32>} : memref<16x28xbf16, #tpu.memory_space<vmem>>, vector<16x4xbf16>,
    %c9 = arith.constant 9 : index
    %c0_21 = arith.constant 0 : index
    %28 = vector.load %arg10[%c9, %c0_21] : memref<32x4xf32, #tpu.memory_space<vmem>>, vector<16x4xf32>
    %29 = arith.truncf %28 : vector<16x4xf32> to vector<16x4xbf16>
    %c0_22 = arith.constant 0 : index
    %c16 = arith.constant 16 : index
    %30 = vector.load %arg11[%c0_22, %c16] : memref<16x28xbf16, #tpu.memory_space<vmem>>, vector<16x4xbf16>
    tpu.vector_store %arg11[%c0_22, %c16], %29 {strides = array<i32>} : memref<16x28xbf16, #tpu.memory_space<vmem>>, vector<16x4xbf16>,
    %c10 = arith.constant 10 : index
    %c0_23 = arith.constant 0 : index
    %31 = vector.load %arg10[%c10, %c0_23] : memref<32x4xf32, #tpu.memory_space<vmem>>, vector<16x4xf32>
    %32 = arith.truncf %31 : vector<16x4xf32> to vector<16x4xbf16>
    %c0_24 = arith.constant 0 : index
    %c20 = arith.constant 20 : index
    %33 = vector.load %arg11[%c0_24, %c20] : memref<16x28xbf16, #tpu.memory_space<vmem>>, vector<16x4xbf16>
    tpu.vector_store %arg11[%c0_24, %c20], %32 {strides = array<i32>} : memref<16x28xbf16, #tpu.memory_space<vmem>>, vector<16x4xbf16>,
    %c11 = arith.constant 11 : index
    %c0_25 = arith.constant 0 : index
    %34 = vector.load %arg10[%c11, %c0_25] : memref<32x4xf32, #tpu.memory_space<vmem>>, vector<16x4xf32>
    %35 = arith.truncf %34 : vector<16x4xf32> to vector<16x4xbf16>
    %c0_26 = arith.constant 0 : index
    %c24 = arith.constant 24 : index
    %36 = vector.load %arg11[%c0_26, %c24] : memref<16x28xbf16, #tpu.memory_space<vmem>>, vector<16x4xbf16>
    tpu.vector_store %arg11[%c0_26, %c24], %35 {strides = array<i32>} : memref<16x28xbf16, #tpu.memory_space<vmem>>, vector<16x4xbf16>,
    %c0_27 = arith.constant 0 : index
    %c0_28 = arith.constant 0 : index
    %37 = vector.load %arg11[%c0_27, %c0_28] : memref<16x28xbf16, #tpu.memory_space<vmem>>, vector<16x28xbf16>
    %c0_29 = arith.constant 0 : index
    %c0_30 = arith.constant 0 : index
    %38 = vector.load %arg5[%c0_29, %c0_30] : memref<28x128xbf16, #tpu.memory_space<vmem>>, vector<28x128xbf16>
    %cst_31 = arith.constant dense<0.000000e+00> : vector<16x128xf32>
    %39 = tpu.matmul %37, %38, %cst_31 {dimension_numbers = #tpu.dot_dimension_numbers<[1], [0], [0], [1], [0, 0, 1, 1], [], []>} : vector<16x28xbf16>, vector<28x128xbf16>, vector<16x128xf32> -> vector<16x128xf32>
    %c0_32 = arith.constant 0 : index
    %c0_33 = arith.constant 0 : index
    %40 = vector.load %arg6[%c0_32, %c0_33] : memref<1x128xf32, #tpu.memory_space<vmem>>, vector<1x128xf32>
    %41 = vector.broadcast %40 : vector<1x128xf32> to vector<16x128xf32>
    %42 = arith.addf %39, %41 : vector<16x128xf32>
    %cst_34 = arith.constant dense<0.000000e+00> : vector<16xf32>
    %43 = vector.multi_reduction <add>, %42, %cst_34 [1] : vector<16x128xf32> to vector<16xf32>
    %44 = vector.shape_cast %43 : vector<16xf32> to vector<16x1xf32>
    %cst_35 = arith.constant 3.125000e-02 : f32
    %45 = vector.broadcast %cst_35 : f32 to vector<16x1xf32>
    %46 = arith.mulf %44, %45 : vector<16x1xf32>
    %47 = vector.broadcast %46 : vector<16x1xf32> to vector<16x128xf32>
    %48 = arith.subf %42, %47 : vector<16x128xf32>
    %49 = tpu.iota {dimensions = array<i32: 1>} : vector<1x128xi32>
    %c32_i32 = arith.constant 32 : i32
    %50 = vector.broadcast %c32_i32 : i32 to vector<1x128xi32>
    %51 = arith.cmpi slt, %49, %50 : vector<1x128xi32>
    %cst_36 = arith.constant 0.000000e+00 : f32
    %52 = vector.shape_cast %51 : vector<1x128xi1> to vector<1x128xi1>
    %53 = vector.broadcast %52 : vector<1x128xi1> to vector<16x128xi1>
    %54 = vector.broadcast %cst_36 : f32 to vector<16x128xf32>
    %55 = arith.select %53, %48, %54 : vector<16x128xi1>, vector<16x128xf32>
    %56 = arith.mulf %55, %55 : vector<16x128xf32>
    %cst_37 = arith.constant dense<0.000000e+00> : vector<16xf32>
    %57 = vector.multi_reduction <add>, %56, %cst_37 [1] : vector<16x128xf32> to vector<16xf32>
    %58 = vector.shape_cast %57 : vector<16xf32> to vector<16x1xf32>
    %cst_38 = arith.constant 3.125000e-02 : f32
    %59 = vector.broadcast %cst_38 : f32 to vector<16x1xf32>
    %60 = arith.mulf %58, %59 : vector<16x1xf32>
    %cst_39 = arith.constant 9.99999974E-6 : f32
    %61 = vector.broadcast %cst_39 : f32 to vector<16x1xf32>
    %62 = arith.addf %60, %61 : vector<16x1xf32>
    %63 = math.rsqrt %62 : vector<16x1xf32>
    %64 = vector.broadcast %63 : vector<16x1xf32> to vector<16x128xf32>
    %65 = arith.mulf %55, %64 : vector<16x128xf32>
    %c0_40 = arith.constant 0 : index
    %c0_41 = arith.constant 0 : index
    %66 = vector.load %arg7[%c0_40, %c0_41] : memref<1x128xf32, #tpu.memory_space<vmem>>, vector<1x128xf32>
    %67 = vector.broadcast %66 : vector<1x128xf32> to vector<16x128xf32>
    %68 = arith.mulf %65, %67 : vector<16x128xf32>
    %c0_42 = arith.constant 0 : index
    %c0_43 = arith.constant 0 : index
    %69 = vector.load %arg8[%c0_42, %c0_43] : memref<1x128xf32, #tpu.memory_space<vmem>>, vector<1x128xf32>
    %70 = vector.broadcast %69 : vector<1x128xf32> to vector<16x128xf32>
    %71 = arith.addf %68, %70 : vector<16x128xf32>
    %c0_44 = arith.constant 0 : index
    %c0_45 = arith.constant 0 : index
    %c0_46 = arith.constant 0 : index
    %72 = vector.load %arg9[%c0_44, %c0_45, %c0_46] : memref<1x16x128xf32, #tpu.memory_space<vmem>>, vector<1x16x128xf32>
    %73 = vector.shape_cast %72 : vector<1x16x128xf32> to vector<16x128xf32>
    %74 = vector.shape_cast %71 : vector<16x128xf32> to vector<1x16x128xf32>
    tpu.vector_store %arg9[%c0_44, %c0_45, %c0_46], %74 {strides = array<i32>} : memref<1x16x128xf32, #tpu.memory_space<vmem>>, vector<1x16x128xf32>,
    return
  }
  func.func @transform_0(%arg0: i32, %arg1: i32) -> (i32, i32, i32) {
    %c0_i32 = arith.constant 0 : i32
    %c0_i32_0 = arith.constant 0 : i32
    return %arg0, %arg1, %c0_i32 : i32, i32, i32
  }
  func.func @transform_1(%arg0: i32, %arg1: i32) -> (i32, i32, i32) {
    %c2_i32 = arith.constant 2 : i32
    %0 = arith.muli %arg1, %c2_i32 : i32
    %c1_i32 = arith.constant 1 : i32
    %1 = arith.subi %0, %c1_i32 : i32
    %c0_i32 = arith.constant 0 : i32
    %2 = arith.maxsi %1, %c0_i32 : i32
    %c0_i32_0 = arith.constant 0 : i32
    %c0_i32_1 = arith.constant 0 : i32
    return %arg0, %2, %c0_i32_0 : i32, i32, i32
  }
  func.func @transform_2(%arg0: i32, %arg1: i32) -> (i32, i32, i32) {
    %c1_i32 = arith.constant 1 : i32
    %0 = arith.addi %arg1, %c1_i32 : i32
    %c2_i32 = arith.constant 2 : i32
    %1 = arith.muli %0, %c2_i32 : i32
    %c1_i32_0 = arith.constant 1 : i32
    %2 = arith.minsi %1, %c1_i32_0 : i32
    %c0_i32 = arith.constant 0 : i32
    %c0_i32_1 = arith.constant 0 : i32
    return %arg0, %2, %c0_i32 : i32, i32, i32
  }
  func.func @transform_3(%arg0: i32, %arg1: i32) -> (i32, i32) {
    %c0_i32 = arith.constant 0 : i32
    %c0_i32_0 = arith.constant 0 : i32
    %c0_i32_1 = arith.constant 0 : i32
    return %c0_i32, %c0_i32_0 : i32, i32
  }
  func.func @transform_4(%arg0: i32, %arg1: i32) -> (i32, i32) {
    %c0_i32 = arith.constant 0 : i32
    %c0_i32_0 = arith.constant 0 : i32
    %c0_i32_1 = arith.constant 0 : i32
    return %c0_i32, %c0_i32_0 : i32, i32
  }
  func.func @transform_5(%arg0: i32, %arg1: i32) -> (i32, i32) {
    %c0_i32 = arith.constant 0 : i32
    %c0_i32_0 = arith.constant 0 : i32
    %c0_i32_1 = arith.constant 0 : i32
    return %c0_i32, %c0_i32_0 : i32, i32
  }
  func.func @transform_6(%arg0: i32, %arg1: i32) -> (i32, i32) {
    %c0_i32 = arith.constant 0 : i32
    %c0_i32_0 = arith.constant 0 : i32
    %c0_i32_1 = arith.constant 0 : i32
    return %c0_i32, %c0_i32_0 : i32, i32
  }
  func.func @transform_7(%arg0: i32, %arg1: i32) -> (i32, i32, i32) {
    %c0_i32 = arith.constant 0 : i32
    %c0_i32_0 = arith.constant 0 : i32
    return %arg0, %arg1, %c0_i32 : i32, i32, i32
  }
}

</mosaic_0001>

<llo_original>
// kernel: tpu_custom_call.1
$region0: #{tpu_custom_call.1}
  #allocation0 [shape = 'u32[]', space=smem, size = 0x4, offset = 0x4, fixed_abs, tag = 'smem constant byte address 0x4 - core index']
  #allocation1 [shape = 'u32[144,128]{1,0:T(1,128)}', space=vmem, size = 0x12000, scoped, tag = 'internal scratch']
  #allocation2 [shape = 'f32[32,4]{1,0:T(8,128)}', space=vmem, size = 0x4000, scoped, tag = 'scratch operand']
  #allocation3 [shape = 'bf16[16,28]{1,0:T(8,128)(2,1)}', space=vmem, size = 0x1000, scoped, tag = 'scratch operand']
  %s0 = inlined_call_operand.vmem [shape: f32[2,16,4], index: 0, kind: input, shape index: {}]
  %s1 = inlined_call_operand.vmem [shape: f32[2,16,4], index: 1, kind: input, shape index: {}]
  %s2 = inlined_call_operand.vmem [shape: f32[2,16,4], index: 2, kind: input, shape index: {}]
  %s3 = inlined_call_operand.vmem [shape: bf16[28,128], index: 3, kind: input, shape index: {}]
  %s4 = inlined_call_operand.vmem [shape: f32[1,128], index: 4, kind: input, shape index: {}]
  %s5 = inlined_call_operand.vmem [shape: f32[1,128], index: 5, kind: input, shape index: {}]
  %s6 = inlined_call_operand.vmem [shape: f32[1,128], index: 6, kind: input, shape index: {}]
  %s7 = inlined_call_operand.hbm [shape: f32[2,16,128], index: 7, kind: output, shape index: {}]
  %s8 = sld [smem:[#allocation0]]
  $region77: #{tpu_custom_call.1} parent=0
    _
  %s10 = ssub.s32 1, %s8
  %s11 = scalar_select 0, %s10, %s8
  $region1: #{tpu_custom_call.1} parent=0
    #allocation4 [shape = 'u8[16384]{0}', space=vmem, size = 0x4000, scoped, tag = 'output window, operand 0']
    #allocation5 [shape = 's32[2]{0}', space=sflag, size = 0x8, scoped, tag = 'scoped memory for tpu_custom_call.1']
    %12 = vsyncpa [#allocation5], 0
    %s13 = scalar_lea.sflag [#allocation5], 1
    %14 = vsyncpa %s13, 0
    loop: start=0, step=1, limit=4
    $region2: #{tpu_custom_call.1} parent=1 // loop_pre_header
      _
    $region3: #{tpu_custom_call.1} parent=1 // loop_header
      %s16 = sphi 0, %s20
      %p17 = scmp.ge.s32.totalorder %s16, 4
      %s23 = sphi 0, %s35
      %s24 = sphi 0, %s31
      %s25 = sphi 0, %s23
      %s26 = sphi 0, %s24
      %s27 = sphi 0, %s25
      %s28 = sphi 0, %s26
      %s40 = sphi 0, %s42
      %s43 = sphi 0, %s40
      %s44 = sphi 0, %s43
      %s60 = sphi 0, %s44
      %s76 = sphi 0, %s78
      %s79 = sphi 0, %s76
      %s80 = sphi 0, %s79
      %s96 = sphi 0, %s80
      %s112 = sphi 0, %s114
      %s115 = sphi 0, %s112
      %s116 = sphi 0, %s115
      %s132 = sphi 0, %s116
      %s136 = sphi 0, %s136
      %s138 = sphi 0, %s136
      %s139 = sphi 0, %s138
      %s153 = sphi 0, %s139
      %s157 = sphi 0, %s157
      %s159 = sphi 0, %s157
      %s160 = sphi 0, %s159
      %s174 = sphi 0, %s160
      %s178 = sphi 0, %s178
      %s180 = sphi 0, %s178
      %s181 = sphi 0, %s180
      %s195 = sphi 0, %s181
      %s199 = sphi 0, %s199
      %s201 = sphi 0, %s199
      %s202 = sphi 0, %s201
      %s216 = sphi 0, %s202
      %s224 = sphi 0, %s226
      %s227 = sphi 0, %s224
      %s228 = sphi 0, %s227
      %s244 = sphi 0, %s228
    $region4: #{tpu_custom_call.1} parent=1 // loop_header_branch
      %19 = sbr.rel (%p17) target = $region8
    $region5: #{tpu_custom_call.1} parent=1 // loop_body
      %s21 = ssub.s32 %s16, 1
      %s22 = ssub.s32 %s16, 2
      %s29 = sadd.s32 1, %s24
      %p30 = scmp.ge.s32.totalorder %s29, 1
      %s31 = scalar_select %p30, 0, %s29
      %s32 = sadd.s32 1, %s23
      %s33 = scalar_select %p30, %s32, %s23
      %p34 = scmp.ge.s32.totalorder %s33, 2
      %s35 = scalar_select %p34, 0, %s33
      %s36 = ssub.s32 %s23, %s35
      %s37 = ssub.s32 %s24, %s31
      %s38 = sor.u32 %s36, %s37
      %p39 = scmp.eq.s32.totalorder %s38, 0
      %s41 = sadd.s32 %s40, 1
      %s42 = scalar_select %p39, %s40, %s41
      %p45 = pneg %p39
      %p46 = scmp.eq.s32.totalorder %s16, 1
      %p47 = por %p45, %p46
      %p48 = scmp.ne.s32.totalorder %s40, %s43
      %p49 = scmp.eq.s32.totalorder %s16, 0
      %p50 = por %p48, %p49
      %p51 = scmp.ne.s32.totalorder %s40, %s43
      %p52 = scmp.eq.s32.totalorder %s21, 1
      %p53 = por %p51, %p52
      %p54 = scmp.ne.s32.totalorder %s43, %s44
      %p55 = scmp.eq.s32.totalorder %s21, 0
      %p56 = por %p54, %p55
      %p57 = scmp.ne.s32.totalorder %s43, %s44
      %p58 = scmp.eq.s32.totalorder %s22, 1
      %p59 = por %p57, %p58
      %p61 = scmp.ne.s32.totalorder %s44, %s60
      %p62 = scmp.eq.s32.totalorder %s22, 0
      %p63 = por %p61, %p62
      %s64 = smul.u32 %s24, 2
      %s65 = ssub.s32 %s64, 1
      %p66 = scmp.gt.s32.totalorder %s65, 0
      %s67 = scalar_select %p66, %s65, 0
      %s68 = smul.u32 %s31, 2
      %s69 = ssub.s32 %s68, 1
      %p70 = scmp.gt.s32.totalorder %s69, 0
      %s71 = scalar_select %p70, %s69, 0
      %s72 = ssub.s32 %s23, %s35
      %s73 = ssub.s32 %s67, %s71
      %s74 = sor.u32 %s72, %s73
      %p75 = scmp.eq.s32.totalorder %s74, 0
      %s77 = sadd.s32 %s76, 1
      %s78 = scalar_select %p75, %s76, %s77
      %p81 = pneg %p75
      %p82 = scmp.eq.s32.totalorder %s16, 1
      %p83 = por %p81, %p82
      %p84 = scmp.ne.s32.totalorder %s76, %s79
      %p85 = scmp.eq.s32.totalorder %s16, 0
      %p86 = por %p84, %p85
      %p87 = scmp.ne.s32.totalorder %s76, %s79
      %p88 = scmp.eq.s32.totalorder %s21, 1
      %p89 = por %p87, %p88
      %p90 = scmp.ne.s32.totalorder %s79, %s80
      %p91 = scmp.eq.s32.totalorder %s21, 0
      %p92 = por %p90, %p91
      %p93 = scmp.ne.s32.totalorder %s79, %s80
      %p94 = scmp.eq.s32.totalorder %s22, 1
      %p95 = por %p93, %p94
      %p97 = scmp.ne.s32.totalorder %s80, %s96
      %p98 = scmp.eq.s32.totalorder %s22, 0
      %p99 = por %p97, %p98
      %s100 = sadd.s32 %s24, 1
      %s101 = smul.u32 %s100, 2
      %p102 = scmp.lt.s32.totalorder %s101, 1
      %s103 = scalar_select %p102, %s101, 1
      %s104 = sadd.s32 %s31, 1
      %s105 = smul.u32 %s104, 2
      %p106 = scmp.lt.s32.totalorder %s105, 1
      %s107 = scalar_select %p106, %s105, 1
      %s108 = ssub.s32 %s23, %s35
      %s109 = ssub.s32 %s103, %s107
      %s110 = sor.u32 %s108, %s109
      %p111 = scmp.eq.s32.totalorder %s110, 0
      %s113 = sadd.s32 %s112, 1
      %s114 = scalar_select %p111, %s112, %s113
      %p117 = pneg %p111
      %p118 = scmp.eq.s32.totalorder %s16, 1
      %p119 = por %p117, %p118
      %p120 = scmp.ne.s32.totalorder %s112, %s115
      %p121 = scmp.eq.s32.totalorder %s16, 0
      %p122 = por %p120, %p121
      %p123 = scmp.ne.s32.totalorder %s112, %s115
      %p124 = scmp.eq.s32.totalorder %s21, 1
      %p125 = por %p123, %p124
      %p126 = scmp.ne.s32.totalorder %s115, %s116
      %p127 = scmp.eq.s32.totalorder %s21, 0
      %p128 = por %p126, %p127
      %p129 = scmp.ne.s32.totalorder %s115, %s116
      %p130 = scmp.eq.s32.totalorder %s22, 1
      %p131 = por %p129, %p130
      %p133 = scmp.ne.s32.totalorder %s116, %s132
      %p134 = scmp.eq.s32.totalorder %s22, 0
      %p135 = por %p133, %p134
      %s137 = sadd.s32 %s136, 1
      %p140 = scmp.eq.s32.totalorder %s16, 1
      %p141 = scmp.ne.s32.totalorder %s136, %s138
      %p142 = scmp.eq.s32.totalorder %s16, 0
      %p143 = por %p141, %p142
      %p144 = scmp.ne.s32.totalorder %s136, %s138
      %p145 = scmp.eq.s32.totalorder %s21, 1
      %p146 = por %p144, %p145
      %p147 = scmp.ne.s32.totalorder %s138, %s139
      %p148 = scmp.eq.s32.totalorder %s21, 0
      %p149 = por %p147, %p148
      %p150 = scmp.ne.s32.totalorder %s138, %s139
      %p151 = scmp.eq.s32.totalorder %s22, 1
      %p152 = por %p150, %p151
      %p154 = scmp.ne.s32.totalorder %s139, %s153
      %p155 = scmp.eq.s32.totalorder %s22, 0
      %p156 = por %p154, %p155
      %s158 = sadd.s32 %s157, 1
      %p161 = scmp.eq.s32.totalorder %s16, 1
      %p162 = scmp.ne.s32.totalorder %s157, %s159
      %p163 = scmp.eq.s32.totalorder %s16, 0
      %p164 = por %p162, %p163
      %p165 = scmp.ne.s32.totalorder %s157, %s159
      %p166 = scmp.eq.s32.totalorder %s21, 1
      %p167 = por %p165, %p166
      %p168 = scmp.ne.s32.totalorder %s159, %s160
      %p169 = scmp.eq.s32.totalorder %s21, 0
      %p170 = por %p168, %p169
      %p171 = scmp.ne.s32.totalorder %s159, %s160
      %p172 = scmp.eq.s32.totalorder %s22, 1
      %p173 = por %p171, %p172
      %p175 = scmp.ne.s32.totalorder %s160, %s174
      %p176 = scmp.eq.s32.totalorder %s22, 0
      %p177 = por %p175, %p176
      %s179 = sadd.s32 %s178, 1
      %p182 = scmp.eq.s32.totalorder %s16, 1
      %p183 = scmp.ne.s32.totalorder %s178, %s180
      %p184 = scmp.eq.s32.totalorder %s16, 0
      %p185 = por %p183, %p184
      %p186 = scmp.ne.s32.totalorder %s178, %s180
      %p187 = scmp.eq.s32.totalorder %s21, 1
      %p188 = por %p186, %p187
      %p189 = scmp.ne.s32.totalorder %s180, %s181
      %p190 = scmp.eq.s32.totalorder %s21, 0
      %p191 = por %p189, %p190
      %p192 = scmp.ne.s32.totalorder %s180, %s181
      %p193 = scmp.eq.s32.totalorder %s22, 1
      %p194 = por %p192, %p193
      %p196 = scmp.ne.s32.totalorder %s181, %s195
      %p197 = scmp.eq.s32.totalorder %s22, 0
      %p198 = por %p196, %p197
      %s200 = sadd.s32 %s199, 1
      %p203 = scmp.eq.s32.totalorder %s16, 1
      %p204 = scmp.ne.s32.totalorder %s199, %s201
      %p205 = scmp.eq.s32.totalorder %s16, 0
      %p206 = por %p204, %p205
      %p207 = scmp.ne.s32.totalorder %s199, %s201
      %p208 = scmp.eq.s32.totalorder %s21, 1
      %p209 = por %p207, %p208
      %p210 = scmp.ne.s32.totalorder %s201, %s202
      %p211 = scmp.eq.s32.totalorder %s21, 0
      %p212 = por %p210, %p211
      %p213 = scmp.ne.s32.totalorder %s201, %s202
      %p214 = scmp.eq.s32.totalorder %s22, 1
      %p215 = por %p213, %p214
      %p217 = scmp.ne.s32.totalorder %s202, %s216
      %p218 = scmp.eq.s32.totalorder %s22, 0
      %p219 = por %p217, %p218
      %s220 = ssub.s32 %s23, %s35
      %s221 = ssub.s32 %s24, %s31
      %s222 = sor.u32 %s220, %s221
      %p223 = scmp.eq.s32.totalorder %s222, 0
      %s225 = sadd.s32 %s224, 1
      %s226 = scalar_select %p223, %s224, %s225
      %p229 = pneg %p223
      %p230 = scmp.eq.s32.totalorder %s16, 1
      %p231 = por %p229, %p230
      %p232 = scmp.ne.s32.totalorder %s224, %s227
      %p233 = scmp.eq.s32.totalorder %s16, 0
      %p234 = por %p232, %p233
      %p235 = scmp.ne.s32.totalorder %s224, %s227
      %p236 = scmp.eq.s32.totalorder %s21, 1
      %p237 = por %p235, %p236
      %p238 = scmp.ne.s32.totalorder %s227, %s228
      %p239 = scmp.eq.s32.totalorder %s21, 0
      %p240 = por %p238, %p239
      %p241 = scmp.ne.s32.totalorder %s227, %s228
      %p242 = scmp.eq.s32.totalorder %s22, 1
      %p243 = por %p241, %p242
      %p245 = scmp.ne.s32.totalorder %s228, %s244
      %p246 = scmp.eq.s32.totalorder %s22, 0
      %p247 = por %p245, %p246
      %p248 = scmp.le.s32.totalorder 1, %s16
      %p249 = scmp.lt.s32.totalorder %s16, 3
      %p250 = pnand %p248, %p249
      %p251 = pneg %p250
      // Predicated region
      $region9: #{tpu_custom_call.1} parent=5 // pred_check
        _
      $region10: #{tpu_custom_call.1} parent=5 // pred_check_branch
        %253 = sbr.rel (%p250) target = $region12
      $region11: #{tpu_custom_call.1} parent=5 // pred_region
        %s254 = ssub.s32 %s16, 1
        // Predicated region
        $region13: #{tpu_custom_call.1} parent=11 // pred_check
          %p255 = pneg %p149
        $region14: #{tpu_custom_call.1} parent=11 // pred_check_branch
          %257 = sbr.rel (%p255) target = $region16
        $region15: #{tpu_custom_call.1} parent=11 // pred_region
          _
        $region16: #{tpu_custom_call.1} parent=11 // pred_fallthru
          _
        // Predicated region
        $region17: #{tpu_custom_call.1} parent=11 // pred_check
          %p258 = pneg %p170
        $region18: #{tpu_custom_call.1} parent=11 // pred_check_branch
          %260 = sbr.rel (%p258) target = $region20
        $region19: #{tpu_custom_call.1} parent=11 // pred_region
          _
        $region20: #{tpu_custom_call.1} parent=11 // pred_fallthru
          _
        // Predicated region
        $region21: #{tpu_custom_call.1} parent=11 // pred_check
          %p261 = pneg %p191
        $region22: #{tpu_custom_call.1} parent=11 // pred_check_branch
          %263 = sbr.rel (%p261) target = $region24
        $region23: #{tpu_custom_call.1} parent=11 // pred_region
          _
        $region24: #{tpu_custom_call.1} parent=11 // pred_fallthru
          _
        // Predicated region
        $region25: #{tpu_custom_call.1} parent=11 // pred_check
          %p264 = pneg %p212
        $region26: #{tpu_custom_call.1} parent=11 // pred_check_branch
          %266 = sbr.rel (%p264) target = $region28
        $region27: #{tpu_custom_call.1} parent=11 // pred_region
          _
        $region28: #{tpu_custom_call.1} parent=11 // pred_fallthru
          _
      $region12: #{tpu_custom_call.1} parent=5 // pred_fallthru
        _
      %p267 = scmp.lt.s32.totalorder %s16, 2
      // Predicated region
      $region29: #{tpu_custom_call.1} parent=5 // pred_check
        %p268 = pneg %p267
      $region30: #{tpu_custom_call.1} parent=5 // pred_check_branch
        %270 = sbr.rel (%p268) target = $region32
      $region31: #{tpu_custom_call.1} parent=5 // pred_region
        // Predicated region
        $region33: #{tpu_custom_call.1} parent=31 // pred_check
          %p271 = pneg %p50
        $region34: #{tpu_custom_call.1} parent=31 // pred_check_branch
          %273 = sbr.rel (%p271) target = $region36
        $region35: #{tpu_custom_call.1} parent=31 // pred_region
          %s274 = smul.u32 2, %s24
          %p275 = scmp.lt.s32.totalorder %s23, 1
          %s276 = scalar_select %p275, %s23, 1
          %p277 = scmp.lt.s32.totalorder %s274, 1
          %s278 = scalar_select %p277, %s274, 1
          %s279 = smul.addr %s276, 2
          %s280 = sadd.s32 %s278, %s279
          %s281 = smul.addr %s280, 8
          %s282 = scalar_lea.vmem %s0, %s281
          %s283 = smul.u32 2, %s24
        $region36: #{tpu_custom_call.1} parent=31 // pred_fallthru
          _
        // Predicated region
        $region37: #{tpu_custom_call.1} parent=31 // pred_check
          %p284 = pneg %p86
        $region38: #{tpu_custom_call.1} parent=31 // pred_check_branch
          %286 = sbr.rel (%p284) target = $region40
        $region39: #{tpu_custom_call.1} parent=31 // pred_region
          %s287 = smul.u32 %s24, 2
          %s288 = ssub.s32 %s287, 1
          %p289 = scmp.gt.s32.totalorder %s288, 0
          %s290 = scalar_select %p289, %s288, 0
          %p291 = scmp.lt.s32.totalorder %s23, 1
          %s292 = scalar_select %p291, %s23, 1
          %p293 = scmp.lt.s32.totalorder %s290, 1
          %s294 = scalar_select %p293, %s290, 1
          %s295 = smul.addr %s292, 2
          %s296 = sadd.s32 %s294, %s295
          %s297 = smul.addr %s296, 8
          %s298 = scalar_lea.vmem %s1, %s297
          %s299 = smul.u32 %s24, 2
          %s300 = ssub.s32 %s299, 1
          %p301 = scmp.gt.s32.totalorder %s300, 0
          %s302 = scalar_select %p301, %s300, 0
        $region40: #{tpu_custom_call.1} parent=31 // pred_fallthru
          _
        // Predicated region
        $region41: #{tpu_custom_call.1} parent=31 // pred_check
          %p303 = pneg %p122
        $region42: #{tpu_custom_call.1} parent=31 // pred_check_branch
          %305 = sbr.rel (%p303) target = $region44
        $region43: #{tpu_custom_call.1} parent=31 // pred_region
          %s306 = sadd.s32 %s24, 1
          %s307 = smul.u32 %s306, 2
          %p308 = scmp.lt.s32.totalorder %s307, 1
          %s309 = scalar_select %p308, %s307, 1
          %p310 = scmp.lt.s32.totalorder %s23, 1
          %s311 = scalar_select %p310, %s23, 1
          %p312 = scmp.lt.s32.totalorder %s309, 1
          %s313 = scalar_select %p312, %s309, 1
          %s314 = smul.addr %s311, 2
          %s315 = sadd.s32 %s313, %s314
          %s316 = smul.addr %s315, 8
          %s317 = scalar_lea.vmem %s2, %s316
          %s318 = sadd.s32 %s24, 1
          %s319 = smul.u32 %s318, 2
          %p320 = scmp.lt.s32.totalorder %s319, 1
          %s321 = scalar_select %p320, %s319, 1
        $region44: #{tpu_custom_call.1} parent=31 // pred_fallthru
          _
      $region32: #{tpu_custom_call.1} parent=5 // pred_fallthru
        _
      %p322 = scmp.le.s32.totalorder 1, %s16
      %p323 = scmp.lt.s32.totalorder %s16, 3
      %p324 = pnand %p322, %p323
      %p325 = pneg %p324
      // Predicated region
      $region45: #{tpu_custom_call.1} parent=5 // pred_check
        _
      $region46: #{tpu_custom_call.1} parent=5 // pred_check_branch
        %327 = sbr.rel (%p324) target = $region48
      $region47: #{tpu_custom_call.1} parent=5 // pred_region
        %s328 = ssub.s32 %s16, 1
        %s329 = smul.u32 2, %s26
        %p330 = scmp.lt.s32.totalorder %s25, 1
        %s331 = scalar_select %p330, %s25, 1
        %p332 = scmp.lt.s32.totalorder %s329, 1
        %s333 = scalar_select %p332, %s329, 1
        %s334 = smul.addr %s331, 2
        %s335 = sadd.s32 %s333, %s334
        %s336 = smul.addr %s335, 8
        %s337 = scalar_lea.vmem %s0, %s336
        %p338 = pneg %p56
        %p339 = pneg %p53
        %s340 = smul.u32 %s26, 2
        %s341 = ssub.s32 %s340, 1
        %p342 = scmp.gt.s32.totalorder %s341, 0
        %s343 = scalar_select %p342, %s341, 0
        %p344 = scmp.lt.s32.totalorder %s25, 1
        %s345 = scalar_select %p344, %s25, 1
        %p346 = scmp.lt.s32.totalorder %s343, 1
        %s347 = scalar_select %p346, %s343, 1
        %s348 = smul.addr %s345, 2
        %s349 = sadd.s32 %s347, %s348
        %s350 = smul.addr %s349, 8
        %s351 = scalar_lea.vmem %s1, %s350
        %p352 = pneg %p92
        %p353 = pneg %p89
        %s354 = sadd.s32 %s26, 1
        %s355 = smul.u32 %s354, 2
        %p356 = scmp.lt.s32.totalorder %s355, 1
        %s357 = scalar_select %p356, %s355, 1
        %p358 = scmp.lt.s32.totalorder %s25, 1
        %s359 = scalar_select %p358, %s25, 1
        %p360 = scmp.lt.s32.totalorder %s357, 1
        %s361 = scalar_select %p360, %s357, 1
        %s362 = smul.addr %s359, 2
        %s363 = sadd.s32 %s361, %s362
        %s364 = smul.addr %s363, 8
        %s365 = scalar_lea.vmem %s2, %s364
        %p366 = pneg %p128
        %p367 = pneg %p125
        %p368 = pneg %p149
        %p369 = pneg %p146
        %p370 = pneg %p170
        %p371 = pneg %p167
        %p372 = pneg %p191
        %p373 = pneg %p188
        %p374 = pneg %p212
        %p375 = pneg %p209
        %p376 = pneg %p240
        %p377 = pneg %p237
        %s378 = sand.u32 %s227, 1
        %s379 = scalar_lea.sflag [#allocation5], %s378
        %s380 = sand.u32 %s227, 1
        %s381 = smul.addr %s380, 16
        %s382 = scalar_lea.vmem [#allocation4], %s381
        %s383 = smul.u32 2, %s26
        %p384 = scmp.lt.s32.totalorder %s25, 1
        %s385 = scalar_select %p384, %s25, 1
        %p386 = scmp.lt.s32.totalorder %s383, 1
        %s387 = scalar_select %p386, %s383, 1
        %s388 = smul.addr %s385, 2
        %s389 = sadd.s32 %s387, %s388
        %s390 = smul.addr %s389, 8
        %s391 = scalar_lea.vmem %s0, %s390
        %s392 = smul.u32 2, %s26
        %s393 = smul.u32 %s26, 2
        %s394 = ssub.s32 %s393, 1
        %p395 = scmp.gt.s32.totalorder %s394, 0
        %s396 = scalar_select %p395, %s394, 0
        %p397 = scmp.lt.s32.totalorder %s25, 1
        %s398 = scalar_select %p397, %s25, 1
        %p399 = scmp.lt.s32.totalorder %s396, 1
        %s400 = scalar_select %p399, %s396, 1
        %s401 = smul.addr %s398, 2
        %s402 = sadd.s32 %s400, %s401
        %s403 = smul.addr %s402, 8
        %s404 = scalar_lea.vmem %s1, %s403
        %s405 = smul.u32 %s26, 2
        %s406 = ssub.s32 %s405, 1
        %p407 = scmp.gt.s32.totalorder %s406, 0
        %s408 = scalar_select %p407, %s406, 0
        %s409 = sadd.s32 %s26, 1
        %s410 = smul.u32 %s409, 2
        %p411 = scmp.lt.s32.totalorder %s410, 1
        %s412 = scalar_select %p411, %s410, 1
        %p413 = scmp.lt.s32.totalorder %s25, 1
        %s414 = scalar_select %p413, %s25, 1
        %p415 = scmp.lt.s32.totalorder %s412, 1
        %s416 = scalar_select %p415, %s412, 1
        %s417 = smul.addr %s414, 2
        %s418 = sadd.s32 %s416, %s417
        %s419 = smul.addr %s418, 8
        %s420 = scalar_lea.vmem %s2, %s419
        %s421 = sadd.s32 %s26, 1
        %s422 = smul.u32 %s421, 2
        %p423 = scmp.lt.s32.totalorder %s422, 1
        %s424 = scalar_select %p423, %s422, 1
        %s425 = smul.u32 2, %s26
        %p427 = scmp.eq.s32.totalorder %s26, 0
        // Predicated region
        $region49: #{tpu_custom_call.1} parent=47 // pred_check
          %p428 = pneg %p427
        $region50: #{tpu_custom_call.1} parent=47 // pred_check_branch
          %430 = sbr.rel (%p428) target = $region52
        $region51: #{tpu_custom_call.1} parent=47 // pred_region
          %vm431 = vcmask 31744
          %432 = vst.msk [vmem:[#allocation2] sm:$0xff] %vm431, 0.0
        $region52: #{tpu_custom_call.1} parent=47 // pred_fallthru
          _
        %p433 = scmp.gt.s32.totalorder %s26, 0
        // Predicated region
        $region53: #{tpu_custom_call.1} parent=47 // pred_check
          %p434 = pneg %p433
        $region54: #{tpu_custom_call.1} parent=47 // pred_check_branch
          %436 = sbr.rel (%p434) target = $region56
        $region55: #{tpu_custom_call.1} parent=47 // pred_region
          %v437 = vld [vmem:[%s404] sm:$0xff]
          %vm438 = vcmask 31744
          %439 = vst.msk [vmem:[#allocation2] sm:$0xff] %vm438, %v437
        $region56: #{tpu_custom_call.1} parent=47 // pred_fallthru
          _
        %v440 = vld [vmem:[%s391] sm:$0xff]
        %v441 = vld [vmem:[%s391 + $0x8] sm:$0xff]
        %vm442 = vcmask 31744
        %443 = vst.msk [vmem:[#allocation2 + $0x8] sm:$0xff] %vm442, %v440
        %444 = vst.msk [vmem:[#allocation2 + $0x10] sm:$0xff] %vm442, %v441
        // Predicated region
        $region57: #{tpu_custom_call.1} parent=47 // pred_check
          %p445 = pneg %p427
        $region58: #{tpu_custom_call.1} parent=47 // pred_check_branch
          %447 = sbr.rel (%p445) target = $region60
        $region59: #{tpu_custom_call.1} parent=47 // pred_region
          %448 = vst.msk [vmem:[#allocation2 + $0x18] sm:$0xff] %vm442, 0.0
        $region60: #{tpu_custom_call.1} parent=47 // pred_fallthru
          _
        %p449 = scmp.lt.s32.totalorder %s26, 0
        // Predicated region
        $region61: #{tpu_custom_call.1} parent=47 // pred_check
          %p450 = pneg %p449
        $region62: #{tpu_custom_call.1} parent=47 // pred_check_branch
          %452 = sbr.rel (%p450) target = $region64
        $region63: #{tpu_custom_call.1} parent=47 // pred_region
          %v453 = vld [vmem:[%s420] sm:$0xff]
          %454 = vst.msk [vmem:[#allocation2 + $0x18] sm:$0xff] %vm442, %v453
        $region64: #{tpu_custom_call.1} parent=47 // pred_fallthru
          _
        %v455 = vld [vmem:[#allocation2 + $0x5] sm:$0xff]
        %v456 = vld [vmem:[#allocation2 + $0xd] sm:$0xff]
        %v457 = vpack.c.bf16 %v456, %v455
        %v459 = vunpack.c.l.b16 %v457
        %v460 = vunpack.c.h.b16 %v457
        %v461 = vpack.c.b16 %v459, %v459
        %v462 = vpack.c.b16 %v460, %v460
        %vm465 = vcmask 27648
        %466 = vst.msk [vmem:[#allocation3] sm:$0xf] %vm465, %v461
        %467 = vst.msk [vmem:[#allocation3 + $0x4] sm:$0xf] %vm465, %v462
        %v468 = vld [vmem:[#allocation2 + $0x6] sm:$0xff]
        %v469 = vld [vmem:[#allocation2 + $0xe] sm:$0xff]
        %v470 = vpack.c.bf16 %v469, %v468
        %v472 = vunpack.c.l.b16 %v470
        %v473 = vunpack.c.h.b16 %v470
        %v474 = vpack.c.b16 %v472, %v472
        %v475 = vpack.c.b16 %v473, %v473
        %476 = vrot.lane.b32.xlu0 %v474, 4
        %v477 = vpop.permute.xlu0 %476
        %478 = vrot.lane.b32.xlu0 %v475, 4
        %v479 = vpop.permute.xlu0 %478
        %vm482 = vcmask 60448
        %483 = vst.msk [vmem:[#allocation3] sm:$0xf] %vm482, %v477
        %484 = vst.msk [vmem:[#allocation3 + $0x4] sm:$0xf] %vm482, %v479
        %v485 = vld [vmem:[#allocation2 + $0x7] sm:$0xff]
        %v486 = vld [vmem:[#allocation2 + $0xf] sm:$0xff]
        %v487 = vpack.c.bf16 %v486, %v485
        %v489 = vunpack.c.l.b16 %v487
        %v490 = vunpack.c.h.b16 %v487
        %v491 = vpack.c.b16 %v489, %v489
        %v492 = vpack.c.b16 %v490, %v490
        %493 = vrot.lane.b32.xlu0 %v491, 8
        %v494 = vpop.permute.xlu0 %493
        %495 = vrot.lane.b32.xlu0 %v492, 8
        %v496 = vpop.permute.xlu0 %495
        %vm499 = vcmask 93248
        %500 = vst.msk [vmem:[#allocation3] sm:$0xf] %vm499, %v494
        %501 = vst.msk [vmem:[#allocation3 + $0x4] sm:$0xf] %vm499, %v496
        %v502 = vld [vmem:[#allocation2 + $0x8] sm:$0xff]
        %v503 = vld [vmem:[#allocation2 + $0x10] sm:$0xff]
        %v504 = vpack.c.bf16 %v503, %v502
        %v506 = vunpack.c.l.b16 %v504
        %v507 = vunpack.c.h.b16 %v504
        %v508 = vpack.c.b16 %v506, %v506
        %v509 = vpack.c.b16 %v507, %v507
        %510 = vrot.lane.b32.xlu0 %v508, 12
        %v511 = vpop.permute.xlu0 %510
        %512 = vrot.lane.b32.xlu0 %v509, 12
        %v513 = vpop.permute.xlu0 %512
        %vm516 = vcmask 126048
        %517 = vst.msk [vmem:[#allocation3] sm:$0xf] %vm516, %v511
        %518 = vst.msk [vmem:[#allocation3 + $0x4] sm:$0xf] %vm516, %v513
        %v519 = vld [vmem:[#allocation2 + $0x9] sm:$0xff]
        %v520 = vld [vmem:[#allocation2 + $0x11] sm:$0xff]
        %v521 = vpack.c.bf16 %v520, %v519
        %v523 = vunpack.c.l.b16 %v521
        %v524 = vunpack.c.h.b16 %v521
        %v525 = vpack.c.b16 %v523, %v523
        %v526 = vpack.c.b16 %v524, %v524
        %527 = vrot.lane.b32.xlu0 %v525, 16
        %v528 = vpop.permute.xlu0 %527
        %529 = vrot.lane.b32.xlu0 %v526, 16
        %v530 = vpop.permute.xlu0 %529
        %vm533 = vcmask 158848
        %534 = vst.msk [vmem:[#allocation3] sm:$0xf] %vm533, %v528
        %535 = vst.msk [vmem:[#allocation3 + $0x4] sm:$0xf] %vm533, %v530
        %v536 = vld [vmem:[#allocation2 + $0xa] sm:$0xff]
        %v537 = vld [vmem:[#allocation2 + $0x12] sm:$0xff]
        %v538 = vpack.c.bf16 %v537, %v536
        %v540 = vunpack.c.l.b16 %v538
        %v541 = vunpack.c.h.b16 %v538
        %v542 = vpack.c.b16 %v540, %v540
        %v543 = vpack.c.b16 %v541, %v541
        %544 = vrot.lane.b32.xlu0 %v542, 20
        %v545 = vpop.permute.xlu0 %544
        %546 = vrot.lane.b32.xlu0 %v543, 20
        %v547 = vpop.permute.xlu0 %546
        %vm550 = vcmask 191648
        %551 = vst.msk [vmem:[#allocation3] sm:$0xf] %vm550, %v545
        %552 = vst.msk [vmem:[#allocation3 + $0x4] sm:$0xf] %vm550, %v547
        %v553 = vld [vmem:[#allocation2 + $0xb] sm:$0xff]
        %v554 = vld [vmem:[#allocation2 + $0x13] sm:$0xff]
        %v555 = vpack.c.bf16 %v554, %v553
        %v557 = vunpack.c.l.b16 %v555
        %v558 = vunpack.c.h.b16 %v555
        %v559 = vpack.c.b16 %v557, %v557
        %v560 = vpack.c.b16 %v558, %v558
        %561 = vrot.lane.b32.xlu0 %v559, 24
        %v562 = vpop.permute.xlu0 %561
        %563 = vrot.lane.b32.xlu0 %v560, 24
        %v564 = vpop.permute.xlu0 %563
        %vm567 = vcmask 224448
        %568 = vst.msk [vmem:[#allocation3] sm:$0xf] %vm567, %v562
        %569 = vst.msk [vmem:[#allocation3 + $0x4] sm:$0xf] %vm567, %v564
        %v570 = vld [vmem:[#allocation3] sm:$0xf]
        %v571 = vld [vmem:[#allocation3 + $0x4] sm:$0xf]
        %v572 = vld [vmem:[%s3] sm:$0xf]
        %v573 = vld [vmem:[%s3 + $0x4] sm:$0xf]
        %v574 = vld [vmem:[%s3 + $0x8] sm:$0xf]
        %v575 = vld [vmem:[%s3 + $0xc] sm:$0x3]
        %v576 = vld [vmem:[%s4] sm:$0x1]
        %v578 = vlaneseq
        %v579 = vshrl.u32 %v578, 7
        %v580 = vsub.s32 0, %v579
        %v581 = vrot.slane %v576, %v580
        %v585 = vunpack.c.l.b16 %v570
        %v586 = vunpack.c.l.b16 %v571
        %v587 = vpack.c.b16 %v586, %v585
        %v592 = vunpack.c.l.b16 %v572
        %v593 = vunpack.c.l.b16 %v573
        %v594 = vunpack.c.l.b16 %v574
        %v595 = vunpack.c.l.b16 %v575
        %v596 = vpack.c.b16 %v593, %v592
        %v597 = vpack.c.b16 %v595, %v594
        %vm599 = vcmask 228352
        %v601 = vsel %vm599, %v587, 0
        %vm603 = vcmask 1045504
        %v605 = vsel %vm603, %v597, 0
        %607 = vmatprep.subr.bf16.mxu0 0
        %608 = vmatpush1.bf16.msra.mxu0 0
        %609 = vmatprep.subr.bf16.mxu0 0
        %610 = vmatpush1.bf16.msra.mxu0 0
        %611 = vmatprep.subr.bf16.mxu0 0
        %612 = vmatpush1.bf16.msra.mxu0 0
        %613 = vmatprep.subr.bf16.mxu0 0
        %614 = vmatpush1.bf16.msra.mxu0 0
        %615 = vmatprep.subr.bf16.mxu0 0
        %616 = vmatpush1.bf16.msra.mxu0 0
        %617 = vmatprep.subr.bf16.mxu0 0
        %618 = vmatpush1.bf16.msra.mxu0 0
        %619 = vmatprep.subr.bf16.mxu0 0
        %620 = vmatpush1.bf16.msra.mxu0 %v605
        %621 = vmatprep.subr.bf16.mxu0 0
        %622 = vmatpush1.bf16.msra.mxu0 %v596
        %623 = vmatprep.subr.bf16.mxu0 0
        %624 = vmatpush2.bf16.msra.mxu0 0
        %625 = vmatprep.subr.bf16.mxu0 0
        %626 = vmatpush2.bf16.msra.mxu0 0
        %627 = vmatprep.subr.bf16.mxu0 0
        %628 = vmatpush2.bf16.msra.mxu0 0
        %629 = vmatprep.subr.bf16.mxu0 0
        %630 = vmatpush2.bf16.msra.mxu0 0
        %631 = vmatprep.subr.bf16.mxu0 0
        %632 = vmatpush2.bf16.msra.mxu0 0
        %633 = vmatprep.subr.bf16.mxu0 0
        %634 = vmatpush2.bf16.msra.mxu0 0
        %635 = vmatprep.subr.bf16.mxu0 0
        %636 = vmatpush2.bf16.msra.mxu0 0
        %637 = vmatprep.subr.bf16.mxu0 0
        %638 = vmatpush2.bf16.msra.mxu0 0
        %639 = vmatprep.mubr.bf16.mxu0 0
        %640 = vmatmul.mubr.bf16.gmra.mxu0 %v601
        %v641 = vpop.f32.mrf.mxu0
        %v642 = vadd.f32 %v581, %v641
        %v643 = vpop.f32.mrf.mxu0
        %v644 = vpop.f32.mrf.mxu0
        %v645 = vadd.f32 %v581, %v644
        %v646 = vpop.f32.mrf.mxu0
        %647 = vdwg.mxu0
        %648 = vadd.xlane.f32.xlu0 %v642
        %v649 = vpop.xlane.xlu0 %648
        %650 = vadd.xlane.f32.xlu0 %v645
        %v651 = vpop.xlane.xlu0 %650
        %v652 = vmul.f32 %v649, 0.03125
        %v653 = vmul.f32 %v651, 0.03125
        %v654 = vsub.f32 %v642, %v652
        %v655 = vsub.f32 %v645, %v653
        %v656 = vlaneseq
        %v657 = vand.u32 %v656, 127
        %vm658 = vcmp.lt.s32.totalorder %v657, 32
        %v659 = vsel %vm658, 1, 0
        %vm660 = vcmp.eq.s32.totalorder %v659, 1
        %v661 = vsel %vm660, %v654, 0.0
        %v662 = vsel %vm660, %v655, 0.0
        %v663 = vmul.f32 %v661, %v661
        %v664 = vmul.f32 %v662, %v662
        %665 = vadd.xlane.f32.xlu0 %v663
        %v666 = vpop.xlane.xlu0 %665
        %667 = vadd.xlane.f32.xlu0 %v664
        %v668 = vpop.xlane.xlu0 %667
        %v669 = vmul.f32 %v666, 0.03125
        %v670 = vmul.f32 %v668, 0.03125
        %v671 = vadd.f32 %v669, 1e-05
        %v672 = vadd.f32 %v670, 1e-05
        %v673 = vrsqrt.pop %v671
        %v674 = vrsqrt.pop %v672
        %v675 = vmul.f32 %v661, %v673
        %v676 = vmul.f32 %v662, %v674
        %v677 = vld [vmem:[%s5] sm:$0x1]
        %v679 = vlaneseq
        %v680 = vshrl.u32 %v679, 7
        %v681 = vsub.s32 0, %v680
        %v682 = vrot.slane %v677, %v681
        %v684 = vmul.f32 %v675, %v682
        %v685 = vmul.f32 %v676, %v682
        %v686 = vld [vmem:[%s6] sm:$0x1]
        %v688 = vlaneseq
        %v689 = vshrl.u32 %v688, 7
        %v690 = vsub.s32 0, %v689
        %v691 = vrot.slane %v686, %v690
        %v693 = vadd.f32 %v684, %v691
        %v694 = vadd.f32 %v685, %v691
        %695 = vst [vmem:[%s382] sm:$0xff] %v693
        %696 = vst [vmem:[%s382 + $0x8] sm:$0xff] %v694
        %s697 = sand.u32 %s227, 1
        %s698 = scalar_lea.sflag [#allocation5], %s697
        %s699 = sand.u32 %s227, 1
        %s700 = smul.addr %s699, 16
        %s701 = scalar_lea.vmem [#allocation4], %s700
        // Predicated region
        $region65: #{tpu_custom_call.1} parent=47 // pred_check
          %p702 = pneg %p237
        $region66: #{tpu_custom_call.1} parent=47 // pred_check_branch
          %704 = sbr.rel (%p702) target = $region68
        $region67: #{tpu_custom_call.1} parent=47 // pred_region
          %s705 = smul.u32 2, %s26
          %s707 = ssub.s32 256, 256
          %708 = vsyncadd %s698, %s707
          %s709 = smul.addr %s25, 2
          %s710 = sadd.s32 %s705, %s709
          %s711 = smul.addr %s710, 128
          %s712 = scalar_lea.hbm %s7, %s711
          %s713 = sshll.u32 %s701, 4
          %s714 = int_to_ptr.vmem [resolvable:$true] %s713
          %719 = dma.vmem_to_hbm [thread:$0]  %s714, 256, %s712, %s698, 128, 128, 8
        $region68: #{tpu_custom_call.1} parent=47 // pred_fallthru
          _
      $region48: #{tpu_custom_call.1} parent=5 // pred_fallthru
        _
      %p720 = scmp.le.s32.totalorder 2, %s16
      // Predicated region
      $region69: #{tpu_custom_call.1} parent=5 // pred_check
        %p721 = pneg %p720
      $region70: #{tpu_custom_call.1} parent=5 // pred_check_branch
        %723 = sbr.rel (%p721) target = $region72
      $region71: #{tpu_custom_call.1} parent=5 // pred_region
        %s724 = ssub.s32 %s16, 2
        // Predicated region
        $region73: #{tpu_custom_call.1} parent=71 // pred_check
          %p725 = pneg %p243
        $region74: #{tpu_custom_call.1} parent=71 // pred_check_branch
          %727 = sbr.rel (%p725) target = $region76
        $region75: #{tpu_custom_call.1} parent=71 // pred_region
          %s728 = sand.u32 %s228, 1
          %s729 = scalar_lea.sflag [#allocation5], %s728
          %s730 = sand.u32 %s228, 1
          %s731 = smul.addr %s730, 16
          %s732 = scalar_lea.vmem [#allocation4], %s731
          %733 = dma.done %s729, 256
        $region76: #{tpu_custom_call.1} parent=71 // pred_fallthru
          _
      $region72: #{tpu_custom_call.1} parent=5 // pred_fallthru
        _
    $region6: #{tpu_custom_call.1} parent=1 // loop_footer
      %s20 = sadd.s32 1, %s16
    $region7: #{tpu_custom_call.1} parent=1 // loop_footer_branch
      %15 = sbr.rel target = $region3
    $region8: #{tpu_custom_call.1} parent=1 // loop_exit
      _
    %734 = vsyncpa [#allocation5], 1
    %s735 = scalar_lea.sflag [#allocation5], 1
    %736 = vsyncpa %s735, 1

// kernel: tpu_custom_call.1
$region0: #{tpu_custom_call.1}
  #allocation0 [shape = 'u32[]', space=smem, size = 0x4, offset = 0x4, fixed_abs, tag = 'smem constant byte address 0x4 - core index']
  #allocation1 [shape = 'u32[144,128]{1,0:T(1,128)}', space=vmem, size = 0x12000, scoped, tag = 'internal scratch']
  #allocation2 [shape = 'f32[32,4]{1,0:T(8,128)}', space=vmem, size = 0x4000, scoped, tag = 'scratch operand']
  #allocation3 [shape = 'bf16[16,28]{1,0:T(8,128)(2,1)}', space=vmem, size = 0x1000, scoped, tag = 'scratch operand']
  %s0 = inlined_call_operand.vmem [shape: f32[2,16,4], index: 0, kind: input, shape index: {}]
  %s1 = inlined_call_operand.vmem [shape: f32[2,16,4], index: 1, kind: input, shape index: {}]
  %s2 = inlined_call_operand.vmem [shape: f32[2,16,4], index: 2, kind: input, shape index: {}]
  %s3 = inlined_call_operand.vmem [shape: bf16[28,128], index: 3, kind: input, shape index: {}]
  %s4 = inlined_call_operand.vmem [shape: f32[1,128], index: 4, kind: input, shape index: {}]
  %s5 = inlined_call_operand.vmem [shape: f32[1,128], index: 5, kind: input, shape index: {}]
  %s6 = inlined_call_operand.vmem [shape: f32[1,128], index: 6, kind: input, shape index: {}]
  %s7 = inlined_call_operand.hbm [shape: f32[2,16,128], index: 7, kind: output, shape index: {}]
  %s8 = sld [smem:[#allocation0]]
  $region77: #{tpu_custom_call.1} parent=0
    _
  %s10 = ssub.s32 1, %s8
  %s11 = scalar_select 0, %s10, %s8
  $region1: #{tpu_custom_call.1} parent=0
    #allocation4 [shape = 'u8[16384]{0}', space=vmem, size = 0x4000, scoped, tag = 'output window, operand 0']
    #allocation5 [shape = 's32[2]{0}', space=sflag, size = 0x8, scoped, tag = 'scoped memory for tpu_custom_call.1']
    %12 = vsyncpa [#allocation5], 0
    %s13 = scalar_lea.sflag [#allocation5], 1
    %14 = vsyncpa %s13, 0
    loop: start=0, step=1, limit=4
    $region2: #{tpu_custom_call.1} parent=1 // loop_pre_header
      _
    $region3: #{tpu_custom_call.1} parent=1 // loop_header
      %s16 = sphi 0, %s20
      %p17 = scmp.ge.s32.totalorder %s16, 4
      %s23 = sphi 0, %s35
      %s24 = sphi 0, %s31
      %s25 = sphi 0, %s23
      %s26 = sphi 0, %s24
      %s27 = sphi 0, %s25
      %s28 = sphi 0, %s26
      %s40 = sphi 0, %s42
      %s43 = sphi 0, %s40
      %s44 = sphi 0, %s43
      %s60 = sphi 0, %s44
      %s76 = sphi 0, %s78
      %s79 = sphi 0, %s76
      %s80 = sphi 0, %s79
      %s96 = sphi 0, %s80
      %s112 = sphi 0, %s114
      %s115 = sphi 0, %s112
      %s116 = sphi 0, %s115
      %s132 = sphi 0, %s116
      %s136 = sphi 0, %s136
      %s138 = sphi 0, %s136
      %s139 = sphi 0, %s138
      %s153 = sphi 0, %s139
      %s157 = sphi 0, %s157
      %s159 = sphi 0, %s157
      %s160 = sphi 0, %s159
      %s174 = sphi 0, %s160
      %s178 = sphi 0, %s178
      %s180 = sphi 0, %s178
      %s181 = sphi 0, %s180
      %s195 = sphi 0, %s181
      %s199 = sphi 0, %s199
      %s201 = sphi 0, %s199
      %s202 = sphi 0, %s201
      %s216 = sphi 0, %s202
      %s224 = sphi 0, %s226
      %s227 = sphi 0, %s224
      %s228 = sphi 0, %s227
      %s244 = sphi 0, %s228
    $region4: #{tpu_custom_call.1} parent=1 // loop_header_branch
      %19 = sbr.rel (%p17) target = $region8
    $region5: #{tpu_custom_call.1} parent=1 // loop_body
      %s21 = ssub.s32 %s16, 1
      %s22 = ssub.s32 %s16, 2
      %s29 = sadd.s32 1, %s24
      %p30 = scmp.ge.s32.totalorder %s29, 1
      %s31 = scalar_select %p30, 0, %s29
      %s32 = sadd.s32 1, %s23
      %s33 = scalar_select %p30, %s32, %s23
      %p34 = scmp.ge.s32.totalorder %s33, 2
      %s35 = scalar_select %p34, 0, %s33
      %s36 = ssub.s32 %s23, %s35
      %s37 = ssub.s32 %s24, %s31
      %s38 = sor.u32 %s36, %s37
      %p39 = scmp.eq.s32.totalorder %s38, 0
      %s41 = sadd.s32 %s40, 1
      %s42 = scalar_select %p39, %s40, %s41
      %p45 = pneg %p39
      %p46 = scmp.eq.s32.totalorder %s16, 1
      %p47 = por %p45, %p46
      %p48 = scmp.ne.s32.totalorder %s40, %s43
      %p49 = scmp.eq.s32.totalorder %s16, 0
      %p50 = por %p48, %p49
      %p51 = scmp.ne.s32.totalorder %s40, %s43
      %p52 = scmp.eq.s32.totalorder %s21, 1
      %p53 = por %p51, %p52
      %p54 = scmp.ne.s32.totalorder %s43, %s44
      %p55 = scmp.eq.s32.totalorder %s21, 0
      %p56 = por %p54, %p55
      %p57 = scmp.ne.s32.totalorder %s43, %s44
      %p58 = scmp.eq.s32.totalorder %s22, 1
      %p59 = por %p57, %p58
      %p61 = scmp.ne.s32.totalorder %s44, %s60
      %p62 = scmp.eq.s32.totalorder %s22, 0
      %p63 = por %p61, %p62
      %s64 = smul.u32 %s24, 2
      %s65 = ssub.s32 %s64, 1
      %p66 = scmp.gt.s32.totalorder %s65, 0
      %s67 = scalar_select %p66, %s65, 0
      %s68 = smul.u32 %s31, 2
      %s69 = ssub.s32 %s68, 1
      %p70 = scmp.gt.s32.totalorder %s69, 0
      %s71 = scalar_select %p70, %s69, 0
      %s72 = ssub.s32 %s23, %s35
      %s73 = ssub.s32 %s67, %s71
      %s74 = sor.u32 %s72, %s73
      %p75 = scmp.eq.s32.totalorder %s74, 0
      %s77 = sadd.s32 %s76, 1
      %s78 = scalar_select %p75, %s76, %s77
      %p81 = pneg %p75
      %p82 = scmp.eq.s32.totalorder %s16, 1
      %p83 = por %p81, %p82
      %p84 = scmp.ne.s32.totalorder %s76, %s79
      %p85 = scmp.eq.s32.totalorder %s16, 0
      %p86 = por %p84, %p85
      %p87 = scmp.ne.s32.totalorder %s76, %s79
      %p88 = scmp.eq.s32.totalorder %s21, 1
      %p89 = por %p87, %p88
      %p90 = scmp.ne.s32.totalorder %s79, %s80
      %p91 = scmp.eq.s32.totalorder %s21, 0
      %p92 = por %p90, %p91
      %p93 = scmp.ne.s32.totalorder %s79, %s80
      %p94 = scmp.eq.s32.totalorder %s22, 1
      %p95 = por %p93, %p94
      %p97 = scmp.ne.s32.totalorder %s80, %s96
      %p98 = scmp.eq.s32.totalorder %s22, 0
      %p99 = por %p97, %p98
      %s100 = sadd.s32 %s24, 1
      %s101 = smul.u32 %s100, 2
      %p102 = scmp.lt.s32.totalorder %s101, 1
      %s103 = scalar_select %p102, %s101, 1
      %s104 = sadd.s32 %s31, 1
      %s105 = smul.u32 %s104, 2
      %p106 = scmp.lt.s32.totalorder %s105, 1
      %s107 = scalar_select %p106, %s105, 1
      %s108 = ssub.s32 %s23, %s35
      %s109 = ssub.s32 %s103, %s107
      %s110 = sor.u32 %s108, %s109
      %p111 = scmp.eq.s32.totalorder %s110, 0
      %s113 = sadd.s32 %s112, 1
      %s114 = scalar_select %p111, %s112, %s113
      %p117 = pneg %p111
      %p118 = scmp.eq.s32.totalorder %s16, 1
      %p119 = por %p117, %p118
      %p120 = scmp.ne.s32.totalorder %s112, %s115
      %p121 = scmp.eq.s32.totalorder %s16, 0
      %p122 = por %p120, %p121
      %p123 = scmp.ne.s32.totalorder %s112, %s115
      %p124 = scmp.eq.s32.totalorder %s21, 1
      %p125 = por %p123, %p124
      %p126 = scmp.ne.s32.totalorder %s115, %s116
      %p127 = scmp.eq.s32.totalorder %s21, 0
      %p128 = por %p126, %p127
      %p129 = scmp.ne.s32.totalorder %s115, %s116
      %p130 = scmp.eq.s32.totalorder %s22, 1
      %p131 = por %p129, %p130
      %p133 = scmp.ne.s32.totalorder %s116, %s132
      %p134 = scmp.eq.s32.totalorder %s22, 0
      %p135 = por %p133, %p134
      %s137 = sadd.s32 %s136, 1
      %p140 = scmp.eq.s32.totalorder %s16, 1
      %p141 = scmp.ne.s32.totalorder %s136, %s138
      %p142 = scmp.eq.s32.totalorder %s16, 0
      %p143 = por %p141, %p142
      %p144 = scmp.ne.s32.totalorder %s136, %s138
      %p145 = scmp.eq.s32.totalorder %s21, 1
      %p146 = por %p144, %p145
      %p147 = scmp.ne.s32.totalorder %s138, %s139
      %p148 = scmp.eq.s32.totalorder %s21, 0
      %p149 = por %p147, %p148
      %p150 = scmp.ne.s32.totalorder %s138, %s139
      %p151 = scmp.eq.s32.totalorder %s22, 1
      %p152 = por %p150, %p151
      %p154 = scmp.ne.s32.totalorder %s139, %s153
      %p155 = scmp.eq.s32.totalorder %s22, 0
      %p156 = por %p154, %p155
      %s158 = sadd.s32 %s157, 1
      %p161 = scmp.eq.s32.totalorder %s16, 1
      %p162 = scmp.ne.s32.totalorder %s157, %s159
      %p163 = scmp.eq.s32.totalorder %s16, 0
      %p164 = por %p162, %p163
      %p165 = scmp.ne.s32.totalorder %s157, %s159
      %p166 = scmp.eq.s32.totalorder %s21, 1
      %p167 = por %p165, %p166
      %p168 = scmp.ne.s32.totalorder %s159, %s160
      %p169 = scmp.eq.s32.totalorder %s21, 0
      %p170 = por %p168, %p169
      %p171 = scmp.ne.s32.totalorder %s159, %s160
      %p172 = scmp.eq.s32.totalorder %s22, 1
      %p173 = por %p171, %p172
      %p175 = scmp.ne.s32.totalorder %s160, %s174
      %p176 = scmp.eq.s32.totalorder %s22, 0
      %p177 = por %p175, %p176
      %s179 = sadd.s32 %s178, 1
      %p182 = scmp.eq.s32.totalorder %s16, 1
      %p183 = scmp.ne.s32.totalorder %s178, %s180
      %p184 = scmp.eq.s32.totalorder %s16, 0
      %p185 = por %p183, %p184
      %p186 = scmp.ne.s32.totalorder %s178, %s180
      %p187 = scmp.eq.s32.totalorder %s21, 1
      %p188 = por %p186, %p187
      %p189 = scmp.ne.s32.totalorder %s180, %s181
      %p190 = scmp.eq.s32.totalorder %s21, 0
      %p191 = por %p189, %p190
      %p192 = scmp.ne.s32.totalorder %s180, %s181
      %p193 = scmp.eq.s32.totalorder %s22, 1
      %p194 = por %p192, %p193
      %p196 = scmp.ne.s32.totalorder %s181, %s195
      %p197 = scmp.eq.s32.totalorder %s22, 0
      %p198 = por %p196, %p197
      %s200 = sadd.s32 %s199, 1
      %p203 = scmp.eq.s32.totalorder %s16, 1
      %p204 = scmp.ne.s32.totalorder %s199, %s201
      %p205 = scmp.eq.s32.totalorder %s16, 0
      %p206 = por %p204, %p205
      %p207 = scmp.ne.s32.totalorder %s199, %s201
      %p208 = scmp.eq.s32.totalorder %s21, 1
      %p209 = por %p207, %p208
      %p210 = scmp.ne.s32.totalorder %s201, %s202
      %p211 = scmp.eq.s32.totalorder %s21, 0
      %p212 = por %p210, %p211
      %p213 = scmp.ne.s32.totalorder %s201, %s202
      %p214 = scmp.eq.s32.totalorder %s22, 1
      %p215 = por %p213, %p214
      %p217 = scmp.ne.s32.totalorder %s202, %s216
      %p218 = scmp.eq.s32.totalorder %s22, 0
      %p219 = por %p217, %p218
      %s220 = ssub.s32 %s23, %s35
      %s221 = ssub.s32 %s24, %s31
      %s222 = sor.u32 %s220, %s221
      %p223 = scmp.eq.s32.totalorder %s222, 0
      %s225 = sadd.s32 %s224, 1
      %s226 = scalar_select %p223, %s224, %s225
      %p229 = pneg %p223
      %p230 = scmp.eq.s32.totalorder %s16, 1
      %p231 = por %p229, %p230
      %p232 = scmp.ne.s32.totalorder %s224, %s227
      %p233 = scmp.eq.s32.totalorder %s16, 0
      %p234 = por %p232, %p233
      %p235 = scmp.ne.s32.totalorder %s224, %s227
      %p236 = scmp.eq.s32.totalorder %s21, 1
      %p237 = por %p235, %p236
      %p238 = scmp.ne.s32.totalorder %s227, %s228
      %p239 = scmp.eq.s32.totalorder %s21, 0
      %p240 = por %p238, %p239
      %p241 = scmp.ne.s32.totalorder %s227, %s228
      %p242 = scmp.eq.s32.totalorder %s22, 1
      %p243 = por %p241, %p242
      %p245 = scmp.ne.s32.totalorder %s228, %s244
      %p246 = scmp.eq.s32.totalorder %s22, 0
      %p247 = por %p245, %p246
      %p248 = scmp.le.s32.totalorder 1, %s16
      %p249 = scmp.lt.s32.totalorder %s16, 3
      %p250 = pnand %p248, %p249
      %p251 = pneg %p250
      // Predicated region
      $region9: #{tpu_custom_call.1} parent=5 // pred_check
        _
      $region10: #{tpu_custom_call.1} parent=5 // pred_check_branch
        %253 = sbr.rel (%p250) target = $region12
      $region11: #{tpu_custom_call.1} parent=5 // pred_region
        %s254 = ssub.s32 %s16, 1
        // Predicated region
        $region13: #{tpu_custom_call.1} parent=11 // pred_check
          %p255 = pneg %p149
        $region14: #{tpu_custom_call.1} parent=11 // pred_check_branch
          %257 = sbr.rel (%p255) target = $region16
        $region15: #{tpu_custom_call.1} parent=11 // pred_region
          _
        $region16: #{tpu_custom_call.1} parent=11 // pred_fallthru
          _
        // Predicated region
        $region17: #{tpu_custom_call.1} parent=11 // pred_check
          %p258 = pneg %p170
        $region18: #{tpu_custom_call.1} parent=11 // pred_check_branch
          %260 = sbr.rel (%p258) target = $region20
        $region19: #{tpu_custom_call.1} parent=11 // pred_region
          _
        $region20: #{tpu_custom_call.1} parent=11 // pred_fallthru
          _
        // Predicated region
        $region21: #{tpu_custom_call.1} parent=11 // pred_check
          %p261 = pneg %p191
        $region22: #{tpu_custom_call.1} parent=11 // pred_check_branch
          %263 = sbr.rel (%p261) target = $region24
        $region23: #{tpu_custom_call.1} parent=11 // pred_region
          _
        $region24: #{tpu_custom_call.1} parent=11 // pred_fallthru
          _
        // Predicated region
        $region25: #{tpu_custom_call.1} parent=11 // pred_check
          %p264 = pneg %p212
        $region26: #{tpu_custom_call.1} parent=11 // pred_check_branch
          %266 = sbr.rel (%p264) target = $region28
        $region27: #{tpu_custom_call.1} parent=11 // pred_region
          _
        $region28: #{tpu_custom_call.1} parent=11 // pred_fallthru
          _
      $region12: #{tpu_custom_call.1} parent=5 // pred_fallthru
        _
      %p267 = scmp.lt.s32.totalorder %s16, 2
      // Predicated region
      $region29: #{tpu_custom_call.1} parent=5 // pred_check
        %p268 = pneg %p267
      $region30: #{tpu_custom_call.1} parent=5 // pred_check_branch
        %270 = sbr.rel (%p268) target = $region32
      $region31: #{tpu_custom_call.1} parent=5 // pred_region
        // Predicated region
        $region33: #{tpu_custom_call.1} parent=31 // pred_check
          %p271 = pneg %p50
        $region34: #{tpu_custom_call.1} parent=31 // pred_check_branch
          %273 = sbr.rel (%p271) target = $region36
        $region35: #{tpu_custom_call.1} parent=31 // pred_region
          %s274 = smul.u32 2, %s24
          %p275 = scmp.lt.s32.totalorder %s23, 1
          %s276 = scalar_select %p275, %s23, 1
          %p277 = scmp.lt.s32.totalorder %s274, 1
          %s278 = scalar_select %p277, %s274, 1
          %s279 = smul.addr %s276, 2
          %s280 = sadd.s32 %s278, %s279
          %s281 = smul.addr %s280, 8
          %s282 = scalar_lea.vmem %s0, %s281
          %s283 = smul.u32 2, %s24
        $region36: #{tpu_custom_call.1} parent=31 // pred_fallthru
          _
        // Predicated region
        $region37: #{tpu_custom_call.1} parent=31 // pred_check
          %p284 = pneg %p86
        $region38: #{tpu_custom_call.1} parent=31 // pred_check_branch
          %286 = sbr.rel (%p284) target = $region40
        $region39: #{tpu_custom_call.1} parent=31 // pred_region
          %s287 = smul.u32 %s24, 2
          %s288 = ssub.s32 %s287, 1
          %p289 = scmp.gt.s32.totalorder %s288, 0
          %s290 = scalar_select %p289, %s288, 0
          %p291 = scmp.lt.s32.totalorder %s23, 1
          %s292 = scalar_select %p291, %s23, 1
          %p293 = scmp.lt.s32.totalorder %s290, 1
          %s294 = scalar_select %p293, %s290, 1
          %s295 = smul.addr %s292, 2
          %s296 = sadd.s32 %s294, %s295
          %s297 = smul.addr %s296, 8
          %s298 = scalar_lea.vmem %s1, %s297
          %s299 = smul.u32 %s24, 2
          %s300 = ssub.s32 %s299, 1
          %p301 = scmp.gt.s32.totalorder %s300, 0
          %s302 = scalar_select %p301, %s300, 0
        $region40: #{tpu_custom_call.1} parent=31 // pred_fallthru
          _
        // Predicated region
        $region41: #{tpu_custom_call.1} parent=31 // pred_check
          %p303 = pneg %p122
        $region42: #{tpu_custom_call.1} parent=31 // pred_check_branch
          %305 = sbr.rel (%p303) target = $region44
        $region43: #{tpu_custom_call.1} parent=31 // pred_region
          %s306 = sadd.s32 %s24, 1
          %s307 = smul.u32 %s306, 2
          %p308 = scmp.lt.s32.totalorder %s307, 1
          %s309 = scalar_select %p308, %s307, 1
          %p310 = scmp.lt.s32.totalorder %s23, 1
          %s311 = scalar_select %p310, %s23, 1
          %p312 = scmp.lt.s32.totalorder %s309, 1
          %s313 = scalar_select %p312, %s309, 1
          %s314 = smul.addr %s311, 2
          %s315 = sadd.s32 %s313, %s314
          %s316 = smul.addr %s315, 8
          %s317 = scalar_lea.vmem %s2, %s316
          %s318 = sadd.s32 %s24, 1
          %s319 = smul.u32 %s318, 2
          %p320 = scmp.lt.s32.totalorder %s319, 1
          %s321 = scalar_select %p320, %s319, 1
        $region44: #{tpu_custom_call.1} parent=31 // pred_fallthru
          _
      $region32: #{tpu_custom_call.1} parent=5 // pred_fallthru
        _
      %p322 = scmp.le.s32.totalorder 1, %s16
      %p323 = scmp.lt.s32.totalorder %s16, 3
      %p324 = pnand %p322, %p323
      %p325 = pneg %p324
      // Predicated region
      $region45: #{tpu_custom_call.1} parent=5 // pred_check
        _
      $region46: #{tpu_custom_call.1} parent=5 // pred_check_branch
        %327 = sbr.rel (%p324) target = $region48
      $region47: #{tpu_custom_call.1} parent=5 // pred_region
        %s328 = ssub.s32 %s16, 1
        %s329 = smul.u32 2, %s26
        %p330 = scmp.lt.s32.totalorder %s25, 1
        %s331 = scalar_select %p330, %s25, 1
        %p332 = scmp.lt.s32.totalorder %s329, 1
        %s333 = scalar_select %p332, %s329, 1
        %s334 = smul.addr %s331, 2
        %s335 = sadd.s32 %s333, %s334
        %s336 = smul.addr %s335, 8
        %s337 = scalar_lea.vmem %s0, %s336
        %p338 = pneg %p56
        %p339 = pneg %p53
        %s340 = smul.u32 %s26, 2
        %s341 = ssub.s32 %s340, 1
        %p342 = scmp.gt.s32.totalorder %s341, 0
        %s343 = scalar_select %p342, %s341, 0
        %p344 = scmp.lt.s32.totalorder %s25, 1
        %s345 = scalar_select %p344, %s25, 1
        %p346 = scmp.lt.s32.totalorder %s343, 1
        %s347 = scalar_select %p346, %s343, 1
        %s348 = smul.addr %s345, 2
        %s349 = sadd.s32 %s347, %s348
        %s350 = smul.addr %s349, 8
        %s351 = scalar_lea.vmem %s1, %s350
        %p352 = pneg %p92
        %p353 = pneg %p89
        %s354 = sadd.s32 %s26, 1
        %s355 = smul.u32 %s354, 2
        %p356 = scmp.lt.s32.totalorder %s355, 1
        %s357 = scalar_select %p356, %s355, 1
        %p358 = scmp.lt.s32.totalorder %s25, 1
        %s359 = scalar_select %p358, %s25, 1
        %p360 = scmp.lt.s32.totalorder %s357, 1
        %s361 = scalar_select %p360, %s357, 1
        %s362 = smul.addr %s359, 2
        %s363 = sadd.s32 %s361, %s362
        %s364 = smul.addr %s363, 8
        %s365 = scalar_lea.vmem %s2, %s364
        %p366 = pneg %p128
        %p367 = pneg %p125
        %p368 = pneg %p149
        %p369 = pneg %p146
        %p370 = pneg %p170
        %p371 = pneg %p167
        %p372 = pneg %p191
        %p373 = pneg %p188
        %p374 = pneg %p212
        %p375 = pneg %p209
        %p376 = pneg %p240
        %p377 = pneg %p237
        %s378 = sand.u32 %s227, 1
        %s379 = scalar_lea.sflag [#allocation5], %s378
        %s380 = sand.u32 %s227, 1
        %s381 = smul.addr %s380, 16
        %s382 = scalar_lea.vmem [#allocation4], %s381
        %s383 = smul.u32 2, %s26
        %p384 = scmp.lt.s32.totalorder %s25, 1
        %s385 = scalar_select %p384, %s25, 1
        %p386 = scmp.lt.s32.totalorder %s383, 1
        %s387 = scalar_select %p386, %s383, 1
        %s388 = smul.addr %s385, 2
        %s389 = sadd.s32 %s387, %s388
        %s390 = smul.addr %s389, 8
        %s391 = scalar_lea.vmem %s0, %s390
        %s392 = smul.u32 2, %s26
        %s393 = smul.u32 %s26, 2
        %s394 = ssub.s32 %s393, 1
        %p395 = scmp.gt.s32.totalorder %s394, 0
        %s396 = scalar_select %p395, %s394, 0
        %p397 = scmp.lt.s32.totalorder %s25, 1
        %s398 = scalar_select %p397, %s25, 1
        %p399 = scmp.lt.s32.totalorder %s396, 1
        %s400 = scalar_select %p399, %s396, 1
        %s401 = smul.addr %s398, 2
        %s402 = sadd.s32 %s400, %s401
        %s403 = smul.addr %s402, 8
        %s404 = scalar_lea.vmem %s1, %s403
        %s405 = smul.u32 %s26, 2
        %s406 = ssub.s32 %s405, 1
        %p407 = scmp.gt.s32.totalorder %s406, 0
        %s408 = scalar_select %p407, %s406, 0
        %s409 = sadd.s32 %s26, 1
        %s410 = smul.u32 %s409, 2
        %p411 = scmp.lt.s32.totalorder %s410, 1
        %s412 = scalar_select %p411, %s410, 1
        %p413 = scmp.lt.s32.totalorder %s25, 1
        %s414 = scalar_select %p413, %s25, 1
        %p415 = scmp.lt.s32.totalorder %s412, 1
        %s416 = scalar_select %p415, %s412, 1
        %s417 = smul.addr %s414, 2
        %s418 = sadd.s32 %s416, %s417
        %s419 = smul.addr %s418, 8
        %s420 = scalar_lea.vmem %s2, %s419
        %s421 = sadd.s32 %s26, 1
        %s422 = smul.u32 %s421, 2
        %p423 = scmp.lt.s32.totalorder %s422, 1
        %s424 = scalar_select %p423, %s422, 1
        %s425 = smul.u32 2, %s26
        %p427 = scmp.eq.s32.totalorder %s26, 0
        // Predicated region
        $region49: #{tpu_custom_call.1} parent=47 // pred_check
          %p428 = pneg %p427
        $region50: #{tpu_custom_call.1} parent=47 // pred_check_branch
          %430 = sbr.rel (%p428) target = $region52
        $region51: #{tpu_custom_call.1} parent=47 // pred_region
          %vm431 = vcmask 31744
          %432 = vst.msk [vmem:[#allocation2] sm:$0xff] %vm431, 0.0
        $region52: #{tpu_custom_call.1} parent=47 // pred_fallthru
          _
        %p433 = scmp.gt.s32.totalorder %s26, 0
        // Predicated region
        $region53: #{tpu_custom_call.1} parent=47 // pred_check
          %p434 = pneg %p433
        $region54: #{tpu_custom_call.1} parent=47 // pred_check_branch
          %436 = sbr.rel (%p434) target = $region56
        $region55: #{tpu_custom_call.1} parent=47 // pred_region
          %v437 = vld [vmem:[%s404] sm:$0xff]
          %vm438 = vcmask 31744
          %439 = vst.msk [vmem:[#allocation2] sm:$0xff] %vm438, %v437
        $region56: #{tpu_custom_call.1} parent=47 // pred_fallthru
          _
        %v440 = vld [vmem:[%s391] sm:$0xff]
        %v441 = vld [vmem:[%s391 + $0x8] sm:$0xff]
        %vm442 = vcmask 31744
        %443 = vst.msk [vmem:[#allocation2 + $0x8] sm:$0xff] %vm442, %v440
        %444 = vst.msk [vmem:[#allocation2 + $0x10] sm:$0xff] %vm442, %v441
        // Predicated region
        $region57: #{tpu_custom_call.1} parent=47 // pred_check
          %p445 = pneg %p427
        $region58: #{tpu_custom_call.1} parent=47 // pred_check_branch
          %447 = sbr.rel (%p445) target = $region60
        $region59: #{tpu_custom_call.1} parent=47 // pred_region
          %448 = vst.msk [vmem:[#allocation2 + $0x18] sm:$0xff] %vm442, 0.0
        $region60: #{tpu_custom_call.1} parent=47 // pred_fallthru
          _
        %p449 = scmp.lt.s32.totalorder %s26, 0
        // Predicated region
        $region61: #{tpu_custom_call.1} parent=47 // pred_check
          %p450 = pneg %p449
        $region62: #{tpu_custom_call.1} parent=47 // pred_check_branch
          %452 = sbr.rel (%p450) target = $region64
        $region63: #{tpu_custom_call.1} parent=47 // pred_region
          %v453 = vld [vmem:[%s420] sm:$0xff]
          %454 = vst.msk [vmem:[#allocation2 + $0x18] sm:$0xff] %vm442, %v453
        $region64: #{tpu_custom_call.1} parent=47 // pred_fallthru
          _
        %v455 = vld [vmem:[#allocation2 + $0x5] sm:$0xff]
        %v456 = vld [vmem:[#allocation2 + $0xd] sm:$0xff]
        %v457 = vpack.c.bf16 %v456, %v455
        %v459 = vunpack.c.l.b16 %v457
        %v460 = vunpack.c.h.b16 %v457
        %v461 = vpack.c.b16 %v459, %v459
        %v462 = vpack.c.b16 %v460, %v460
        %vm465 = vcmask 27648
        %466 = vst.msk [vmem:[#allocation3] sm:$0xf] %vm465, %v461
        %467 = vst.msk [vmem:[#allocation3 + $0x4] sm:$0xf] %vm465, %v462
        %v468 = vld [vmem:[#allocation2 + $0x6] sm:$0xff]
        %v469 = vld [vmem:[#allocation2 + $0xe] sm:$0xff]
        %v470 = vpack.c.bf16 %v469, %v468
        %v472 = vunpack.c.l.b16 %v470
        %v473 = vunpack.c.h.b16 %v470
        %v474 = vpack.c.b16 %v472, %v472
        %v475 = vpack.c.b16 %v473, %v473
        %476 = vrot.lane.b32.xlu0 %v474, 4
        %v477 = vpop.permute.xlu0 %476
        %478 = vrot.lane.b32.xlu0 %v475, 4
        %v479 = vpop.permute.xlu0 %478
        %vm482 = vcmask 60448
        %483 = vst.msk [vmem:[#allocation3] sm:$0xf] %vm482, %v477
        %484 = vst.msk [vmem:[#allocation3 + $0x4] sm:$0xf] %vm482, %v479
        %v485 = vld [vmem:[#allocation2 + $0x7] sm:$0xff]
        %v486 = vld [vmem:[#allocation2 + $0xf] sm:$0xff]
        %v487 = vpack.c.bf16 %v486, %v485
        %v489 = vunpack.c.l.b16 %v487
        %v490 = vunpack.c.h.b16 %v487
        %v491 = vpack.c.b16 %v489, %v489
        %v492 = vpack.c.b16 %v490, %v490
        %493 = vrot.lane.b32.xlu0 %v491, 8
        %v494 = vpop.permute.xlu0 %493
        %495 = vrot.lane.b32.xlu0 %v492, 8
        %v496 = vpop.permute.xlu0 %495
        %vm499 = vcmask 93248
        %500 = vst.msk [vmem:[#allocation3] sm:$0xf] %vm499, %v494
        %501 = vst.msk [vmem:[#allocation3 + $0x4] sm:$0xf] %vm499, %v496
        %v502 = vld [vmem:[#allocation2 + $0x8] sm:$0xff]
        %v503 = vld [vmem:[#allocation2 + $0x10] sm:$0xff]
        %v504 = vpack.c.bf16 %v503, %v502
        %v506 = vunpack.c.l.b16 %v504
        %v507 = vunpack.c.h.b16 %v504
        %v508 = vpack.c.b16 %v506, %v506
        %v509 = vpack.c.b16 %v507, %v507
        %510 = vrot.lane.b32.xlu0 %v508, 12
        %v511 = vpop.permute.xlu0 %510
        %512 = vrot.lane.b32.xlu0 %v509, 12
        %v513 = vpop.permute.xlu0 %512
        %vm516 = vcmask 126048
        %517 = vst.msk [vmem:[#allocation3] sm:$0xf] %vm516, %v511
        %518 = vst.msk [vmem:[#allocation3 + $0x4] sm:$0xf] %vm516, %v513
        %v519 = vld [vmem:[#allocation2 + $0x9] sm:$0xff]
        %v520 = vld [vmem:[#allocation2 + $0x11] sm:$0xff]
        %v521 = vpack.c.bf16 %v520, %v519
        %v523 = vunpack.c.l.b16 %v521
        %v524 = vunpack.c.h.b16 %v521
        %v525 = vpack.c.b16 %v523, %v523
        %v526 = vpack.c.b16 %v524, %v524
        %527 = vrot.lane.b32.xlu0 %v525, 16
        %v528 = vpop.permute.xlu0 %527
        %529 = vrot.lane.b32.xlu0 %v526, 16
        %v530 = vpop.permute.xlu0 %529
        %vm533 = vcmask 158848
        %534 = vst.msk [vmem:[#allocation3] sm:$0xf] %vm533, %v528
        %535 = vst.msk [vmem:[#allocation3 + $0x4] sm:$0xf] %vm533, %v530
        %v536 = vld [vmem:[#allocation2 + $0xa] sm:$0xff]
        %v537 = vld [vmem:[#allocation2 + $0x12] sm:$0xff]
        %v538 = vpack.c.bf16 %v537, %v536
        %v540 = vunpack.c.l.b16 %v538
        %v541 = vunpack.c.h.b16 %v538
        %v542 = vpack.c.b16 %v540, %v540
        %v543 = vpack.c.b16 %v541, %v541
        %544 = vrot.lane.b32.xlu0 %v542, 20
        %v545 = vpop.permute.xlu0 %544
        %546 = vrot.lane.b32.xlu0 %v543, 20
        %v547 = vpop.permute.xlu0 %546
        %vm550 = vcmask 191648
        %551 = vst.msk [vmem:[#allocation3] sm:$0xf] %vm550, %v545
        %552 = vst.msk [vmem:[#allocation3 + $0x4] sm:$0xf] %vm550, %v547
        %v553 = vld [vmem:[#allocation2 + $0xb] sm:$0xff]
        %v554 = vld [vmem:[#allocation2 + $0x13] sm:$0xff]
        %v555 = vpack.c.bf16 %v554, %v553
        %v557 = vunpack.c.l.b16 %v555
        %v558 = vunpack.c.h.b16 %v555
        %v559 = vpack.c.b16 %v557, %v557
        %v560 = vpack.c.b16 %v558, %v558
        %561 = vrot.lane.b32.xlu0 %v559, 24
        %v562 = vpop.permute.xlu0 %561
        %563 = vrot.lane.b32.xlu0 %v560, 24
        %v564 = vpop.permute.xlu0 %563
        %vm567 = vcmask 224448
        %568 = vst.msk [vmem:[#allocation3] sm:$0xf] %vm567, %v562
        %569 = vst.msk [vmem:[#allocation3 + $0x4] sm:$0xf] %vm567, %v564
        %v570 = vld [vmem:[#allocation3] sm:$0xf]
        %v571 = vld [vmem:[#allocation3 + $0x4] sm:$0xf]
        %v572 = vld [vmem:[%s3] sm:$0xf]
        %v573 = vld [vmem:[%s3 + $0x4] sm:$0xf]
        %v574 = vld [vmem:[%s3 + $0x8] sm:$0xf]
        %v575 = vld [vmem:[%s3 + $0xc] sm:$0x3]
        %v576 = vld [vmem:[%s4] sm:$0x1]
        %v578 = vlaneseq
        %v579 = vshrl.u32 %v578, 7
        %v580 = vsub.s32 0, %v579
        %v581 = vrot.slane %v576, %v580
        %v585 = vunpack.c.l.b16 %v570
        %v586 = vunpack.c.l.b16 %v571
        %v587 = vpack.c.b16 %v586, %v585
        %v592 = vunpack.c.l.b16 %v572
        %v593 = vunpack.c.l.b16 %v573
        %v594 = vunpack.c.l.b16 %v574
        %v595 = vunpack.c.l.b16 %v575
        %v596 = vpack.c.b16 %v593, %v592
        %v597 = vpack.c.b16 %v595, %v594
        %vm599 = vcmask 228352
        %v601 = vsel %vm599, %v587, 0
        %vm603 = vcmask 1045504
        %v605 = vsel %vm603, %v597, 0
        %607 = vmatprep.subr.bf16.mxu0 0
        %608 = vmatpush1.bf16.msra.mxu0 0
        %609 = vmatprep.subr.bf16.mxu0 0
        %610 = vmatpush1.bf16.msra.mxu0 0
        %611 = vmatprep.subr.bf16.mxu0 0
        %612 = vmatpush1.bf16.msra.mxu0 0
        %613 = vmatprep.subr.bf16.mxu0 0
        %614 = vmatpush1.bf16.msra.mxu0 0
        %615 = vmatprep.subr.bf16.mxu0 0
        %616 = vmatpush1.bf16.msra.mxu0 0
        %617 = vmatprep.subr.bf16.mxu0 0
        %618 = vmatpush1.bf16.msra.mxu0 0
        %619 = vmatprep.subr.bf16.mxu0 0
        %620 = vmatpush1.bf16.msra.mxu0 %v605
        %621 = vmatprep.subr.bf16.mxu0 0
        %622 = vmatpush1.bf16.msra.mxu0 %v596
        %623 = vmatprep.subr.bf16.mxu0 0
        %624 = vmatpush2.bf16.msra.mxu0 0
        %625 = vmatprep.subr.bf16.mxu0 0
        %626 = vmatpush2.bf16.msra.mxu0 0
        %627 = vmatprep.subr.bf16.mxu0 0
        %628 = vmatpush2.bf16.msra.mxu0 0
        %629 = vmatprep.subr.bf16.mxu0 0
        %630 = vmatpush2.bf16.msra.mxu0 0
        %631 = vmatprep.subr.bf16.mxu0 0
        %632 = vmatpush2.bf16.msra.mxu0 0
        %633 = vmatprep.subr.bf16.mxu0 0
        %634 = vmatpush2.bf16.msra.mxu0 0
        %635 = vmatprep.subr.bf16.mxu0 0
        %636 = vmatpush2.bf16.msra.mxu0 0
        %637 = vmatprep.subr.bf16.mxu0 0
        %638 = vmatpush2.bf16.msra.mxu0 0
        %639 = vmatprep.mubr.bf16.mxu0 0
        %640 = vmatmul.mubr.bf16.gmra.mxu0 %v601
        %v641 = vpop.f32.mrf.mxu0
        %v642 = vadd.f32 %v581, %v641
        %v643 = vpop.f32.mrf.mxu0
        %v644 = vpop.f32.mrf.mxu0
        %v645 = vadd.f32 %v581, %v644
        %v646 = vpop.f32.mrf.mxu0
        %647 = vdwg.mxu0
        %648 = vadd.xlane.f32.xlu0 %v642
        %v649 = vpop.xlane.xlu0 %648
        %650 = vadd.xlane.f32.xlu0 %v645
        %v651 = vpop.xlane.xlu0 %650
        %v652 = vmul.f32 %v649, 0.03125
        %v653 = vmul.f32 %v651, 0.03125
        %v654 = vsub.f32 %v642, %v652
        %v655 = vsub.f32 %v645, %v653
        %v656 = vlaneseq
        %v657 = vand.u32 %v656, 127
        %vm658 = vcmp.lt.s32.totalorder %v657, 32
        %v659 = vsel %vm658, 1, 0
        %vm660 = vcmp.eq.s32.totalorder %v659, 1
        %v661 = vsel %vm660, %v654, 0.0
        %v662 = vsel %vm660, %v655, 0.0
        %v663 = vmul.f32 %v661, %v661
        %v664 = vmul.f32 %v662, %v662
        %665 = vadd.xlane.f32.xlu0 %v663
        %v666 = vpop.xlane.xlu0 %665
        %667 = vadd.xlane.f32.xlu0 %v664
        %v668 = vpop.xlane.xlu0 %667
        %v669 = vmul.f32 %v666, 0.03125
        %v670 = vmul.f32 %v668, 0.03125
        %v671 = vadd.f32 %v669, 1e-05
        %v672 = vadd.f32 %v670, 1e-05
        %v673 = vrsqrt.pop %v671
        %v674 = vrsqrt.pop %v672
        %v675 = vmul.f32 %v661, %v673
        %v676 = vmul.f32 %v662, %v674
        %v677 = vld [vmem:[%s5] sm:$0x1]
        %v679 = vlaneseq
        %v680 = vshrl.u32 %v679, 7
        %v681 = vsub.s32 0, %v680
        %v682 = vrot.slane %v677, %v681
        %v684 = vmul.f32 %v675, %v682
        %v685 = vmul.f32 %v676, %v682
        %v686 = vld [vmem:[%s6] sm:$0x1]
        %v688 = vlaneseq
        %v689 = vshrl.u32 %v688, 7
        %v690 = vsub.s32 0, %v689
        %v691 = vrot.slane %v686, %v690
        %v693 = vadd.f32 %v684, %v691
        %v694 = vadd.f32 %v685, %v691
        %695 = vst [vmem:[%s382] sm:$0xff] %v693
        %696 = vst [vmem:[%s382 + $0x8] sm:$0xff] %v694
        %s697 = sand.u32 %s227, 1
        %s698 = scalar_lea.sflag [#allocation5], %s697
        %s699 = sand.u32 %s227, 1
        %s700 = smul.addr %s699, 16
        %s701 = scalar_lea.vmem [#allocation4], %s700
        // Predicated region
        $region65: #{tpu_custom_call.1} parent=47 // pred_check
          %p702 = pneg %p237
        $region66: #{tpu_custom_call.1} parent=47 // pred_check_branch
          %704 = sbr.rel (%p702) target = $region68
        $region67: #{tpu_custom_call.1} parent=47 // pred_region
          %s705 = smul.u32 2, %s26
          %s707 = ssub.s32 256, 256
          %708 = vsyncadd %s698, %s707
          %s709 = smul.addr %s25, 2
          %s710 = sadd.s32 %s705, %s709
          %s711 = smul.addr %s710, 128
          %s712 = scalar_lea.hbm %s7, %s711
          %s713 = sshll.u32 %s701, 4
          %s714 = int_to_ptr.vmem [resolvable:$true] %s713
          %719 = dma.vmem_to_hbm [thread:$0]  %s714, 256, %s712, %s698, 128, 128, 8
        $region68: #{tpu_custom_call.1} parent=47 // pred_fallthru
          _
      $region48: #{tpu_custom_call.1} parent=5 // pred_fallthru
        _
      %p720 = scmp.le.s32.totalorder 2, %s16
      // Predicated region
      $region69: #{tpu_custom_call.1} parent=5 // pred_check
        %p721 = pneg %p720
      $region70: #{tpu_custom_call.1} parent=5 // pred_check_branch
        %723 = sbr.rel (%p721) target = $region72
      $region71: #{tpu_custom_call.1} parent=5 // pred_region
        %s724 = ssub.s32 %s16, 2
        // Predicated region
        $region73: #{tpu_custom_call.1} parent=71 // pred_check
          %p725 = pneg %p243
        $region74: #{tpu_custom_call.1} parent=71 // pred_check_branch
          %727 = sbr.rel (%p725) target = $region76
        $region75: #{tpu_custom_call.1} parent=71 // pred_region
          %s728 = sand.u32 %s228, 1
          %s729 = scalar_lea.sflag [#allocation5], %s728
          %s730 = sand.u32 %s228, 1
          %s731 = smul.addr %s730, 16
          %s732 = scalar_lea.vmem [#allocation4], %s731
          %733 = dma.done %s729, 256
        $region76: #{tpu_custom_call.1} parent=71 // pred_fallthru
          _
      $region72: #{tpu_custom_call.1} parent=5 // pred_fallthru
        _
    $region6: #{tpu_custom_call.1} parent=1 // loop_footer
      %s20 = sadd.s32 1, %s16
    $region7: #{tpu_custom_call.1} parent=1 // loop_footer_branch
      %15 = sbr.rel target = $region3
    $region8: #{tpu_custom_call.1} parent=1 // loop_exit
      _
    %734 = vsyncpa [#allocation5], 1
    %s735 = scalar_lea.sflag [#allocation5], 1
    %736 = vsyncpa %s735, 1

</llo_original>
